<compile_context>
chip_gen: v7x
topology: tpu7x:2x2x1
jax: 0.10.0
libtpu: 0.0.40
codegen_flags: <defaults>
</compile_context>

<pallas_src>
import functools

import jax
import jax.numpy as jnp
from jax import lax
from jax.experimental import pallas as pl
from jax.experimental.pallas import tpu as pltpu


def _round_up(x, m):
    return (x + m - 1) // m * m


def _aggregator_kernel(x_ref, w_ref, b_ref, g_ref, beta_ref, seg_ref, o_ref,
                       *, d_out, eps):
    step = pl.program_id(1)
    s_pad = o_ref.shape[0]
    tile_n = x_ref.shape[0]

    @pl.when(step == 0)
    def _init():
        o_ref[...] = jnp.zeros_like(o_ref)

    # ---- Linear: y = x @ W + b  (bf16 MXU inputs, f32 accumulation) ----
    x = x_ref[...].astype(jnp.bfloat16)                  # in-kernel cast (VPU)
    y = jnp.dot(x, w_ref[...], preferred_element_type=jnp.float32)
    y = y + b_ref[...]                                   # [tile_n, d_out_pad] f32

    # ---- LayerNorm, one-pass stats over the true d_out lanes.
    # Padded lanes of y are exactly 0 (W columns and bias are zero-padded), so the
    # full-lane sums already equal the true-lane sums -> no mask needed.
    inv_d = jnp.float32(1.0 / d_out)
    mean = jnp.sum(y, axis=-1, keepdims=True) * inv_d
    var = jnp.sum(y * y, axis=-1, keepdims=True) * inv_d - mean * mean
    y_norm = (y - mean) * lax.rsqrt(var + eps) * g_ref[...] + beta_ref[...]
    # gamma padded lanes are 0; beta padded lanes are 0 except lane d_out which is 1.0,
    # so y_norm carries the per-row "count" for free in that spare lane.

    # ---- segment sum via one-hot matmul (row counts ride along in lane d_out) ----
    seg = seg_ref[...]                                   # [1, tile_n] int32
    seg_iota = lax.broadcasted_iota(jnp.int32, (s_pad, tile_n), 0)
    onehot = (seg_iota == seg).astype(jnp.bfloat16)      # 0/1 exact in bf16
    o_ref[...] += jnp.dot(onehot, y_norm.astype(jnp.bfloat16),
                          preferred_element_type=jnp.float32)


def aggregator_forward(x, weight, bias, gamma, beta, batch, *, num_segments,
                       eps=1e-5, tile_n=1024, num_cores=2):
    """x: [N, D_in] f32, weight: [D_out, D_in] (PyTorch layout), batch: [N] int."""
    n, d_in = x.shape
    d_out = weight.shape[0]

    d_out_pad = _round_up(d_out + 1, 128)        # +1 guarantees a spare counts lane
    s_pad = _round_up(max(num_segments, 1), 8)

    # Clamp tile_n for tiny inputs; keep it a multiple of 128 so the seg block stays
    # lane-dense and the x block second-minor dim stays sublane-aligned.
    tile_n = max(128, min(tile_n, _round_up(-(-n // num_cores), 128)))
    tiles_per_core = -(-n // (num_cores * tile_n))
    n_pad = num_cores * tiles_per_core * tile_n

    # x streamed unpadded in the lane dim; only row-pad (zeros) when needed.
    x_p = x if n_pad == n else jnp.pad(x, ((0, n_pad - n), (0, 0)))
    w_p = jnp.zeros((d_in, d_out_pad), jnp.bfloat16).at[:, :d_out].set(
        weight.T.astype(jnp.bfloat16))
    b_p = jnp.zeros((1, d_out_pad), jnp.float32).at[0, :d_out].set(
        bias.astype(jnp.float32))
    g_p = jnp.zeros((1, d_out_pad), jnp.float32).at[0, :d_out].set(
        gamma.astype(jnp.float32))
    beta_p = jnp.zeros((1, d_out_pad), jnp.float32).at[0, :d_out].set(
        beta.astype(jnp.float32)).at[0, d_out].set(1.0)   # counts lane = 1.0
    # Padded rows get segment id == s_pad so they match no one-hot row (dropped).
    seg_p = jnp.full((1, n_pad), s_pad, jnp.int32).at[0, :n].set(
        batch.astype(jnp.int32))

    kernel = functools.partial(_aggregator_kernel, d_out=d_out, eps=eps)

    flops = 2 * n_pad * d_in * d_out_pad + 2 * n_pad * s_pad * d_out_pad
    bytes_accessed = (x_p.size * x_p.dtype.itemsize + w_p.size * 2
                      + seg_p.size * 4 + (b_p.size + g_p.size + beta_p.size) * 4
                      + num_cores * s_pad * d_out_pad * 4)

    partials = pl.pallas_call(
        kernel,
        out_shape=jax.ShapeDtypeStruct((num_cores, s_pad, d_out_pad), jnp.float32),
        grid_spec=pltpu.PrefetchScalarGridSpec(
            num_scalar_prefetch=0,
            grid=(num_cores, tiles_per_core),
            in_specs=[
                pl.BlockSpec((tile_n, d_in),
                             lambda c, i: (c * tiles_per_core + i, 0)),   # x tile (f32)
                pl.BlockSpec((d_in, d_out_pad), lambda c, i: (0, 0)),     # W (resident)
                pl.BlockSpec((1, d_out_pad), lambda c, i: (0, 0)),        # bias
                pl.BlockSpec((1, d_out_pad), lambda c, i: (0, 0)),        # gamma
                pl.BlockSpec((1, d_out_pad), lambda c, i: (0, 0)),        # beta(+counts)
                pl.BlockSpec((1, tile_n),
                             lambda c, i: (0, c * tiles_per_core + i)),   # batch ids
            ],
            out_specs=pl.BlockSpec((None, s_pad, d_out_pad),
                                   lambda c, i: (c, 0, 0)),
        ),
        compiler_params=pltpu.CompilerParams(
            dimension_semantics=("parallel", "arbitrary"),
            vmem_limit_bytes=32 * 1024 * 1024),
        cost_estimate=pl.CostEstimate(
            flops=flops, transcendentals=n_pad, bytes_accessed=bytes_accessed),
    )(x_p, w_p, b_p, g_p, beta_p, seg_p)

    totals = jnp.sum(partials, axis=0)                   # trivial cross-core combine
    sums = totals[:num_segments, :d_out]
    counts = totals[:num_segments, d_out:d_out + 1]      # fused row counts
    return sums / jnp.maximum(counts, 1.0)               # exact divide; empty segment -> 0


def aggregator_reference_mixed(x, weight, bias, gamma, beta, batch, *,
                               num_segments, eps=1e-5):
    """Pure-JAX reference mirroring the kernel's mixed precision (bf16 MXU inputs)."""
    y = jnp.dot(x.astype(jnp.bfloat16), weight.T.astype(jnp.bfloat16),
                preferred_element_type=jnp.float32) + bias
    mean = jnp.mean(y, axis=-1, keepdims=True)
    var = jnp.mean((y - mean) ** 2, axis=-1, keepdims=True)
    y = (y - mean) * lax.rsqrt(var + eps) * gamma + beta
    y = y.astype(jnp.bfloat16).astype(jnp.float32)
    sums = jax.ops.segment_sum(y, batch, num_segments=num_segments)
    counts = jax.ops.segment_sum(jnp.ones((x.shape[0],), jnp.float32), batch,
                                 num_segments=num_segments)
    return sums / jnp.maximum(counts, 1.0)[:, None]


def aggregator_reference_f32(x, weight, bias, gamma, beta, batch, *,
                             num_segments, eps=1e-5):
    y = x @ weight.T + bias
    mean = jnp.mean(y, axis=-1, keepdims=True)
    var = jnp.mean((y - mean) ** 2, axis=-1, keepdims=True)
    y = (y - mean) * lax.rsqrt(var + eps) * gamma + beta
    sums = jax.ops.segment_sum(y, batch, num_segments=num_segments)
    counts = jax.ops.segment_sum(jnp.ones((x.shape[0],), jnp.float32), batch,
                                 num_segments=num_segments)
    return sums / jnp.maximum(counts, 1.0)[:, None]


if __name__ == "__main__":
    key = jax.random.PRNGKey(0)
    k_x, k_w, k_b, k_g, k_beta, k_seg = jax.random.split(key, 6)

    N, D_IN, D_OUT, NUM_SEG = 600, 48, 32, 5

    x = jax.random.normal(k_x, (N, D_IN), dtype=jnp.float32)
    weight = jax.random.normal(k_w, (D_OUT, D_IN), dtype=jnp.float32) * 0.1
    bias = jax.random.normal(k_b, (D_OUT,), dtype=jnp.float32) * 0.1
    gamma = jnp.ones((D_OUT,), dtype=jnp.float32) + \
        0.05 * jax.random.normal(k_g, (D_OUT,), dtype=jnp.float32)
    beta = 0.05 * jax.random.normal(k_beta, (D_OUT,), dtype=jnp.float32)
    batch = jax.random.randint(k_seg, (N,), 0, NUM_SEG, dtype=jnp.int32)

    out = aggregator_forward(x, weight, bias, gamma, beta, batch,
                             num_segments=NUM_SEG)
    out = jax.block_until_ready(out)
    assert out.shape == (NUM_SEG, D_OUT)

    ref_mixed = aggregator_reference_mixed(x, weight, bias, gamma, beta, batch,
                                           num_segments=NUM_SEG)
    assert jnp.allclose(out, ref_mixed, atol=1e-2, rtol=1e-2), \
        f"mixed-precision max abs err {jnp.max(jnp.abs(out - ref_mixed))}"

    ref_f32 = aggregator_reference_f32(x, weight, bias, gamma, beta, batch,
                                       num_segments=NUM_SEG)
    assert jnp.allclose(out, ref_f32, atol=1e-1, rtol=1e-1), \
        f"f32 max abs err {jnp.max(jnp.abs(out - ref_f32))}"

    print("KERNEL_OK")
</pallas_src>

<mosaic_0001>
module attributes {stable_mosaic.version = 11 : i64} {
  func.func @_aggregator_kernel(%arg0: i32, %arg1: i32, %arg2: memref<384x48xf32, #tpu.memory_space<vmem>>, %arg3: memref<48x128xbf16, #tpu.memory_space<vmem>>, %arg4: memref<1x128xf32, #tpu.memory_space<vmem>>, %arg5: memref<1x128xf32, #tpu.memory_space<vmem>>, %arg6: memref<1x128xf32, #tpu.memory_space<vmem>>, %arg7: memref<1x384xi32, #tpu.memory_space<vmem>>, %arg8: memref<1x8x128xf32, #tpu.memory_space<vmem>>) attributes {dimension_semantics = [#tpu.dimension_semantics<parallel>, #tpu.dimension_semantics<arbitrary>], iteration_bounds = array<i64: 2, 1>, scalar_prefetch = 0 : i64, scratch_operands = 0 : i64, tpu.core_type = #tpu.core_type<tc>, window_params = [{transform_indices = @transform_0, window_bounds = array<i64: 384, 48>}, {pipeline_mode = #tpu.pipeline_mode<synchronous>, transform_indices = @transform_1, window_bounds = array<i64: 48, 128>}, {pipeline_mode = #tpu.pipeline_mode<synchronous>, transform_indices = @transform_2, window_bounds = array<i64: 1, 128>}, {pipeline_mode = #tpu.pipeline_mode<synchronous>, transform_indices = @transform_3, window_bounds = array<i64: 1, 128>}, {pipeline_mode = #tpu.pipeline_mode<synchronous>, transform_indices = @transform_4, window_bounds = array<i64: 1, 128>}, {transform_indices = @transform_5, window_bounds = array<i64: 1, 384>}, {transform_indices = @transform_6, window_bounds = array<i64: 1, 8, 128>}]} {
    %c0_i32 = arith.constant 0 : i32
    %0 = arith.cmpi eq, %arg1, %c0_i32 : i32
    %1 = arith.extui %0 : i1 to i32
    %c0_i32_0 = arith.constant 0 : i32
    %2 = arith.cmpi ne, %1, %c0_i32_0 : i32
    scf.if %2 {
      %cst_24 = arith.constant 0.000000e+00 : f32
      %49 = vector.broadcast %cst_24 : f32 to vector<8x128xf32>
      %c0_25 = arith.constant 0 : index
      %c0_26 = arith.constant 0 : index
      %c0_27 = arith.constant 0 : index
      %50 = vector.load %arg8[%c0_25, %c0_26, %c0_27] : memref<1x8x128xf32, #tpu.memory_space<vmem>>, vector<1x8x128xf32>
      %51 = vector.shape_cast %50 : vector<1x8x128xf32> to vector<8x128xf32>
      %52 = vector.shape_cast %49 : vector<8x128xf32> to vector<1x8x128xf32>
      tpu.vector_store %arg8[%c0_25, %c0_26, %c0_27], %52 {strides = array<i32>} : memref<1x8x128xf32, #tpu.memory_space<vmem>>, vector<1x8x128xf32>,
    } else {
    }
    %c0 = arith.constant 0 : index
    %c0_1 = arith.constant 0 : index
    %3 = vector.load %arg2[%c0, %c0_1] : memref<384x48xf32, #tpu.memory_space<vmem>>, vector<384x48xf32>
    %4 = arith.truncf %3 : vector<384x48xf32> to vector<384x48xbf16>
    %c0_2 = arith.constant 0 : index
    %c0_3 = arith.constant 0 : index
    %5 = vector.load %arg3[%c0_2, %c0_3] : memref<48x128xbf16, #tpu.memory_space<vmem>>, vector<48x128xbf16>
    %cst = arith.constant dense<0.000000e+00> : vector<384x128xf32>
    %6 = tpu.matmul %4, %5, %cst {dimension_numbers = #tpu.dot_dimension_numbers<[1], [0], [0], [1], [0, 0, 1, 1], [], []>} : vector<384x48xbf16>, vector<48x128xbf16>, vector<384x128xf32> -> vector<384x128xf32>
    %c0_4 = arith.constant 0 : index
    %c0_5 = arith.constant 0 : index
    %7 = vector.load %arg4[%c0_4, %c0_5] : memref<1x128xf32, #tpu.memory_space<vmem>>, vector<1x128xf32>
    %8 = vector.broadcast %7 : vector<1x128xf32> to vector<384x128xf32>
    %9 = arith.addf %6, %8 : vector<384x128xf32>
    %cst_6 = arith.constant dense<0.000000e+00> : vector<384xf32>
    %10 = vector.multi_reduction <add>, %9, %cst_6 [1] : vector<384x128xf32> to vector<384xf32>
    %11 = vector.shape_cast %10 : vector<384xf32> to vector<384x1xf32>
    %cst_7 = arith.constant 3.125000e-02 : f32
    %12 = vector.broadcast %cst_7 : f32 to vector<384x1xf32>
    %13 = arith.mulf %11, %12 : vector<384x1xf32>
    %14 = arith.mulf %9, %9 : vector<384x128xf32>
    %cst_8 = arith.constant dense<0.000000e+00> : vector<384xf32>
    %15 = vector.multi_reduction <add>, %14, %cst_8 [1] : vector<384x128xf32> to vector<384xf32>
    %16 = vector.shape_cast %15 : vector<384xf32> to vector<384x1xf32>
    %cst_9 = arith.constant 3.125000e-02 : f32
    %17 = vector.broadcast %cst_9 : f32 to vector<384x1xf32>
    %18 = arith.mulf %16, %17 : vector<384x1xf32>
    %19 = arith.mulf %13, %13 : vector<384x1xf32>
    %20 = arith.subf %18, %19 : vector<384x1xf32>
    %21 = vector.broadcast %13 : vector<384x1xf32> to vector<384x128xf32>
    %22 = arith.subf %9, %21 : vector<384x128xf32>
    %cst_10 = arith.constant 9.99999974E-6 : f32
    %23 = vector.broadcast %cst_10 : f32 to vector<384x1xf32>
    %24 = arith.addf %20, %23 : vector<384x1xf32>
    %25 = math.rsqrt %24 : vector<384x1xf32>
    %26 = vector.broadcast %25 : vector<384x1xf32> to vector<384x128xf32>
    %27 = arith.mulf %22, %26 : vector<384x128xf32>
    %c0_11 = arith.constant 0 : index
    %c0_12 = arith.constant 0 : index
    %28 = vector.load %arg5[%c0_11, %c0_12] : memref<1x128xf32, #tpu.memory_space<vmem>>, vector<1x128xf32>
    %29 = vector.broadcast %28 : vector<1x128xf32> to vector<384x128xf32>
    %30 = arith.mulf %27, %29 : vector<384x128xf32>
    %c0_13 = arith.constant 0 : index
    %c0_14 = arith.constant 0 : index
    %31 = vector.load %arg6[%c0_13, %c0_14] : memref<1x128xf32, #tpu.memory_space<vmem>>, vector<1x128xf32>
    %32 = vector.broadcast %31 : vector<1x128xf32> to vector<384x128xf32>
    %33 = arith.addf %30, %32 : vector<384x128xf32>
    %c0_15 = arith.constant 0 : index
    %c0_16 = arith.constant 0 : index
    %34 = vector.load %arg7[%c0_15, %c0_16] : memref<1x384xi32, #tpu.memory_space<vmem>>, vector<1x384xi32>
    %35 = tpu.iota {dimensions = array<i32: 0>} : vector<8x384xi32>
    %36 = vector.broadcast %34 : vector<1x384xi32> to vector<8x384xi32>
    %37 = arith.cmpi eq, %35, %36 : vector<8x384xi32>
    %38 = arith.extui %37 : vector<8x384xi1> to vector<8x384xi32>
    %39 = arith.sitofp %38 : vector<8x384xi32> to vector<8x384xf32>
    %40 = arith.truncf %39 : vector<8x384xf32> to vector<8x384xbf16>
    %c0_17 = arith.constant 0 : index
    %c0_18 = arith.constant 0 : index
    %c0_19 = arith.constant 0 : index
    %41 = vector.load %arg8[%c0_17, %c0_18, %c0_19] : memref<1x8x128xf32, #tpu.memory_space<vmem>>, vector<1x8x128xf32>
    %42 = vector.shape_cast %41 : vector<1x8x128xf32> to vector<8x128xf32>
    %43 = arith.truncf %33 : vector<384x128xf32> to vector<384x128xbf16>
    %cst_20 = arith.constant dense<0.000000e+00> : vector<8x128xf32>
    %44 = tpu.matmul %40, %43, %cst_20 {dimension_numbers = #tpu.dot_dimension_numbers<[1], [0], [0], [1], [0, 0, 1, 1], [], []>} : vector<8x384xbf16>, vector<384x128xbf16>, vector<8x128xf32> -> vector<8x128xf32>
    %45 = arith.addf %42, %44 : vector<8x128xf32>
    %c0_21 = arith.constant 0 : index
    %c0_22 = arith.constant 0 : index
    %c0_23 = arith.constant 0 : index
    %46 = vector.load %arg8[%c0_21, %c0_22, %c0_23] : memref<1x8x128xf32, #tpu.memory_space<vmem>>, vector<1x8x128xf32>
    %47 = vector.shape_cast %46 : vector<1x8x128xf32> to vector<8x128xf32>
    %48 = vector.shape_cast %45 : vector<8x128xf32> to vector<1x8x128xf32>
    tpu.vector_store %arg8[%c0_21, %c0_22, %c0_23], %48 {strides = array<i32>} : memref<1x8x128xf32, #tpu.memory_space<vmem>>, vector<1x8x128xf32>,
    return
  }
  func.func @transform_0(%arg0: i32, %arg1: i32) -> (i32, i32) {
    %c1_i32 = arith.constant 1 : i32
    %0 = arith.muli %arg0, %c1_i32 : i32
    %1 = arith.addi %0, %arg1 : i32
    %c0_i32 = arith.constant 0 : i32
    %c0_i32_0 = arith.constant 0 : i32
    return %1, %c0_i32 : i32, i32
  }
  func.func @transform_1(%arg0: i32, %arg1: i32) -> (i32, i32) {
    %c0_i32 = arith.constant 0 : i32
    %c0_i32_0 = arith.constant 0 : i32
    %c0_i32_1 = arith.constant 0 : i32
    return %c0_i32, %c0_i32_0 : i32, i32
  }
  func.func @transform_2(%arg0: i32, %arg1: i32) -> (i32, i32) {
    %c0_i32 = arith.constant 0 : i32
    %c0_i32_0 = arith.constant 0 : i32
    %c0_i32_1 = arith.constant 0 : i32
    return %c0_i32, %c0_i32_0 : i32, i32
  }
  func.func @transform_3(%arg0: i32, %arg1: i32) -> (i32, i32) {
    %c0_i32 = arith.constant 0 : i32
    %c0_i32_0 = arith.constant 0 : i32
    %c0_i32_1 = arith.constant 0 : i32
    return %c0_i32, %c0_i32_0 : i32, i32
  }
  func.func @transform_4(%arg0: i32, %arg1: i32) -> (i32, i32) {
    %c0_i32 = arith.constant 0 : i32
    %c0_i32_0 = arith.constant 0 : i32
    %c0_i32_1 = arith.constant 0 : i32
    return %c0_i32, %c0_i32_0 : i32, i32
  }
  func.func @transform_5(%arg0: i32, %arg1: i32) -> (i32, i32) {
    %c1_i32 = arith.constant 1 : i32
    %0 = arith.muli %arg0, %c1_i32 : i32
    %1 = arith.addi %0, %arg1 : i32
    %c0_i32 = arith.constant 0 : i32
    %c0_i32_0 = arith.constant 0 : i32
    return %c0_i32, %1 : i32, i32
  }
  func.func @transform_6(%arg0: i32, %arg1: i32) -> (i32, i32, i32) {
    %c0_i32 = arith.constant 0 : i32
    %c0_i32_0 = arith.constant 0 : i32
    %c0_i32_1 = arith.constant 0 : i32
    return %arg0, %c0_i32, %c0_i32_0 : i32, i32, i32
  }
}

</mosaic_0001>

<llo_original>
// kernel: tpu_custom_call.1
$region0: #{tpu_custom_call.1}
  #allocation0 [shape = 'u32[]', space=smem, size = 0x4, offset = 0x4, fixed_abs, tag = 'smem constant byte address 0x4 - core index']
  #allocation1 [shape = 'u32[144,128]{1,0:T(1,128)}', space=vmem, size = 0x12000, scoped, tag = 'internal scratch']
  %s0 = inlined_call_operand.vmem [shape: f32[768,48], index: 0, kind: input, shape index: {}]
  %s1 = inlined_call_operand.vmem [shape: bf16[48,128], index: 1, kind: input, shape index: {}]
  %s2 = inlined_call_operand.vmem [shape: f32[1,128], index: 2, kind: input, shape index: {}]
  %s3 = inlined_call_operand.vmem [shape: f32[1,128], index: 3, kind: input, shape index: {}]
  %s4 = inlined_call_operand.vmem [shape: f32[1,128], index: 4, kind: input, shape index: {}]
  %s5 = inlined_call_operand.vmem [shape: s32[1,768], index: 5, kind: input, shape index: {}]
  %s6 = inlined_call_operand.hbm [shape: f32[2,8,128], index: 6, kind: output, shape index: {}]
  %s7 = sld [smem:[#allocation0]]
  $region61: #{tpu_custom_call.1} parent=0
    _
  %s9 = ssub.s32 1, %s7
  %s10 = scalar_select 0, %s9, %s7
  $region1: #{tpu_custom_call.1} parent=0
    #allocation2 [shape = 'u8[8192]{0}', space=vmem, size = 0x2000, scoped, tag = 'output window, operand 0']
    #allocation3 [shape = 's32[2]{0}', space=sflag, size = 0x8, scoped, tag = 'scoped memory for tpu_custom_call.1']
    %11 = vsyncpa [#allocation3], 0
    %s12 = scalar_lea.sflag [#allocation3], 1
    %13 = vsyncpa %s12, 0
    loop: start=0, step=1, limit=4
    $region2: #{tpu_custom_call.1} parent=1 // loop_pre_header
      _
    $region3: #{tpu_custom_call.1} parent=1 // loop_header
      %s15 = sphi 0, %s19
      %p16 = scmp.ge.s32.totalorder %s15, 4
      %s22 = sphi 0, %s34
      %s23 = sphi 0, %s30
      %s24 = sphi 0, %s22
      %s25 = sphi 0, %s23
      %s26 = sphi 0, %s24
      %s27 = sphi 0, %s25
      %s39 = sphi 0, %s41
      %s42 = sphi 0, %s39
      %s43 = sphi 0, %s42
      %s59 = sphi 0, %s43
      %s63 = sphi 0, %s63
      %s65 = sphi 0, %s63
      %s66 = sphi 0, %s65
      %s80 = sphi 0, %s66
      %s84 = sphi 0, %s84
      %s86 = sphi 0, %s84
      %s87 = sphi 0, %s86
      %s101 = sphi 0, %s87
      %s105 = sphi 0, %s105
      %s107 = sphi 0, %s105
      %s108 = sphi 0, %s107
      %s122 = sphi 0, %s108
      %s126 = sphi 0, %s126
      %s128 = sphi 0, %s126
      %s129 = sphi 0, %s128
      %s143 = sphi 0, %s129
      %s151 = sphi 0, %s153
      %s154 = sphi 0, %s151
      %s155 = sphi 0, %s154
      %s171 = sphi 0, %s155
      %s177 = sphi 0, %s179
      %s180 = sphi 0, %s177
      %s181 = sphi 0, %s180
      %s197 = sphi 0, %s181
    $region4: #{tpu_custom_call.1} parent=1 // loop_header_branch
      %18 = sbr.rel (%p16) target = $region8
    $region5: #{tpu_custom_call.1} parent=1 // loop_body
      %s20 = ssub.s32 %s15, 1
      %s21 = ssub.s32 %s15, 2
      %s28 = sadd.s32 1, %s23
      %p29 = scmp.ge.s32.totalorder %s28, 1
      %s30 = scalar_select %p29, 0, %s28
      %s31 = sadd.s32 1, %s22
      %s32 = scalar_select %p29, %s31, %s22
      %p33 = scmp.ge.s32.totalorder %s32, 2
      %s34 = scalar_select %p33, 0, %s32
      %s35 = sadd.s32 %s22, %s23
      %s36 = sadd.s32 %s34, %s30
      %s37 = ssub.s32 %s35, %s36
      %p38 = scmp.eq.s32.totalorder %s37, 0
      %s40 = sadd.s32 %s39, 1
      %s41 = scalar_select %p38, %s39, %s40
      %p44 = pneg %p38
      %p45 = scmp.eq.s32.totalorder %s15, 1
      %p46 = por %p44, %p45
      %p47 = scmp.ne.s32.totalorder %s39, %s42
      %p48 = scmp.eq.s32.totalorder %s15, 0
      %p49 = por %p47, %p48
      %p50 = scmp.ne.s32.totalorder %s39, %s42
      %p51 = scmp.eq.s32.totalorder %s20, 1
      %p52 = por %p50, %p51
      %p53 = scmp.ne.s32.totalorder %s42, %s43
      %p54 = scmp.eq.s32.totalorder %s20, 0
      %p55 = por %p53, %p54
      %p56 = scmp.ne.s32.totalorder %s42, %s43
      %p57 = scmp.eq.s32.totalorder %s21, 1
      %p58 = por %p56, %p57
      %p60 = scmp.ne.s32.totalorder %s43, %s59
      %p61 = scmp.eq.s32.totalorder %s21, 0
      %p62 = por %p60, %p61
      %s64 = sadd.s32 %s63, 1
      %p67 = scmp.eq.s32.totalorder %s15, 1
      %p68 = scmp.ne.s32.totalorder %s63, %s65
      %p69 = scmp.eq.s32.totalorder %s15, 0
      %p70 = por %p68, %p69
      %p71 = scmp.ne.s32.totalorder %s63, %s65
      %p72 = scmp.eq.s32.totalorder %s20, 1
      %p73 = por %p71, %p72
      %p74 = scmp.ne.s32.totalorder %s65, %s66
      %p75 = scmp.eq.s32.totalorder %s20, 0
      %p76 = por %p74, %p75
      %p77 = scmp.ne.s32.totalorder %s65, %s66
      %p78 = scmp.eq.s32.totalorder %s21, 1
      %p79 = por %p77, %p78
      %p81 = scmp.ne.s32.totalorder %s66, %s80
      %p82 = scmp.eq.s32.totalorder %s21, 0
      %p83 = por %p81, %p82
      %s85 = sadd.s32 %s84, 1
      %p88 = scmp.eq.s32.totalorder %s15, 1
      %p89 = scmp.ne.s32.totalorder %s84, %s86
      %p90 = scmp.eq.s32.totalorder %s15, 0
      %p91 = por %p89, %p90
      %p92 = scmp.ne.s32.totalorder %s84, %s86
      %p93 = scmp.eq.s32.totalorder %s20, 1
      %p94 = por %p92, %p93
      %p95 = scmp.ne.s32.totalorder %s86, %s87
      %p96 = scmp.eq.s32.totalorder %s20, 0
      %p97 = por %p95, %p96
      %p98 = scmp.ne.s32.totalorder %s86, %s87
      %p99 = scmp.eq.s32.totalorder %s21, 1
      %p100 = por %p98, %p99
      %p102 = scmp.ne.s32.totalorder %s87, %s101
      %p103 = scmp.eq.s32.totalorder %s21, 0
      %p104 = por %p102, %p103
      %s106 = sadd.s32 %s105, 1
      %p109 = scmp.eq.s32.totalorder %s15, 1
      %p110 = scmp.ne.s32.totalorder %s105, %s107
      %p111 = scmp.eq.s32.totalorder %s15, 0
      %p112 = por %p110, %p111
      %p113 = scmp.ne.s32.totalorder %s105, %s107
      %p114 = scmp.eq.s32.totalorder %s20, 1
      %p115 = por %p113, %p114
      %p116 = scmp.ne.s32.totalorder %s107, %s108
      %p117 = scmp.eq.s32.totalorder %s20, 0
      %p118 = por %p116, %p117
      %p119 = scmp.ne.s32.totalorder %s107, %s108
      %p120 = scmp.eq.s32.totalorder %s21, 1
      %p121 = por %p119, %p120
      %p123 = scmp.ne.s32.totalorder %s108, %s122
      %p124 = scmp.eq.s32.totalorder %s21, 0
      %p125 = por %p123, %p124
      %s127 = sadd.s32 %s126, 1
      %p130 = scmp.eq.s32.totalorder %s15, 1
      %p131 = scmp.ne.s32.totalorder %s126, %s128
      %p132 = scmp.eq.s32.totalorder %s15, 0
      %p133 = por %p131, %p132
      %p134 = scmp.ne.s32.totalorder %s126, %s128
      %p135 = scmp.eq.s32.totalorder %s20, 1
      %p136 = por %p134, %p135
      %p137 = scmp.ne.s32.totalorder %s128, %s129
      %p138 = scmp.eq.s32.totalorder %s20, 0
      %p139 = por %p137, %p138
      %p140 = scmp.ne.s32.totalorder %s128, %s129
      %p141 = scmp.eq.s32.totalorder %s21, 1
      %p142 = por %p140, %p141
      %p144 = scmp.ne.s32.totalorder %s129, %s143
      %p145 = scmp.eq.s32.totalorder %s21, 0
      %p146 = por %p144, %p145
      %s147 = sadd.s32 %s22, %s23
      %s148 = sadd.s32 %s34, %s30
      %s149 = ssub.s32 %s147, %s148
      %p150 = scmp.eq.s32.totalorder %s149, 0
      %s152 = sadd.s32 %s151, 1
      %s153 = scalar_select %p150, %s151, %s152
      %p156 = pneg %p150
      %p157 = scmp.eq.s32.totalorder %s15, 1
      %p158 = por %p156, %p157
      %p159 = scmp.ne.s32.totalorder %s151, %s154
      %p160 = scmp.eq.s32.totalorder %s15, 0
      %p161 = por %p159, %p160
      %p162 = scmp.ne.s32.totalorder %s151, %s154
      %p163 = scmp.eq.s32.totalorder %s20, 1
      %p164 = por %p162, %p163
      %p165 = scmp.ne.s32.totalorder %s154, %s155
      %p166 = scmp.eq.s32.totalorder %s20, 0
      %p167 = por %p165, %p166
      %p168 = scmp.ne.s32.totalorder %s154, %s155
      %p169 = scmp.eq.s32.totalorder %s21, 1
      %p170 = por %p168, %p169
      %p172 = scmp.ne.s32.totalorder %s155, %s171
      %p173 = scmp.eq.s32.totalorder %s21, 0
      %p174 = por %p172, %p173
      %s175 = ssub.s32 %s22, %s34
      %p176 = scmp.eq.s32.totalorder %s175, 0
      %s178 = sadd.s32 %s177, 1
      %s179 = scalar_select %p176, %s177, %s178
      %p182 = pneg %p176
      %p183 = scmp.eq.s32.totalorder %s15, 1
      %p184 = por %p182, %p183
      %p185 = scmp.ne.s32.totalorder %s177, %s180
      %p186 = scmp.eq.s32.totalorder %s15, 0
      %p187 = por %p185, %p186
      %p188 = scmp.ne.s32.totalorder %s177, %s180
      %p189 = scmp.eq.s32.totalorder %s20, 1
      %p190 = por %p188, %p189
      %p191 = scmp.ne.s32.totalorder %s180, %s181
      %p192 = scmp.eq.s32.totalorder %s20, 0
      %p193 = por %p191, %p192
      %p194 = scmp.ne.s32.totalorder %s180, %s181
      %p195 = scmp.eq.s32.totalorder %s21, 1
      %p196 = por %p194, %p195
      %p198 = scmp.ne.s32.totalorder %s181, %s197
      %p199 = scmp.eq.s32.totalorder %s21, 0
      %p200 = por %p198, %p199
      %p201 = scmp.le.s32.totalorder 1, %s15
      %p202 = scmp.lt.s32.totalorder %s15, 3
      %p203 = pnand %p201, %p202
      %p204 = pneg %p203
      // Predicated region
      $region9: #{tpu_custom_call.1} parent=5 // pred_check
        _
      $region10: #{tpu_custom_call.1} parent=5 // pred_check_branch
        %206 = sbr.rel (%p203) target = $region12
      $region11: #{tpu_custom_call.1} parent=5 // pred_region
        %s207 = ssub.s32 %s15, 1
        // Predicated region
        $region13: #{tpu_custom_call.1} parent=11 // pred_check
          %p208 = pneg %p76
        $region14: #{tpu_custom_call.1} parent=11 // pred_check_branch
          %210 = sbr.rel (%p208) target = $region16
        $region15: #{tpu_custom_call.1} parent=11 // pred_region
          _
        $region16: #{tpu_custom_call.1} parent=11 // pred_fallthru
          _
        // Predicated region
        $region17: #{tpu_custom_call.1} parent=11 // pred_check
          %p211 = pneg %p97
        $region18: #{tpu_custom_call.1} parent=11 // pred_check_branch
          %213 = sbr.rel (%p211) target = $region20
        $region19: #{tpu_custom_call.1} parent=11 // pred_region
          _
        $region20: #{tpu_custom_call.1} parent=11 // pred_fallthru
          _
        // Predicated region
        $region21: #{tpu_custom_call.1} parent=11 // pred_check
          %p214 = pneg %p118
        $region22: #{tpu_custom_call.1} parent=11 // pred_check_branch
          %216 = sbr.rel (%p214) target = $region24
        $region23: #{tpu_custom_call.1} parent=11 // pred_region
          _
        $region24: #{tpu_custom_call.1} parent=11 // pred_fallthru
          _
        // Predicated region
        $region25: #{tpu_custom_call.1} parent=11 // pred_check
          %p217 = pneg %p139
        $region26: #{tpu_custom_call.1} parent=11 // pred_check_branch
          %219 = sbr.rel (%p217) target = $region28
        $region27: #{tpu_custom_call.1} parent=11 // pred_region
          _
        $region28: #{tpu_custom_call.1} parent=11 // pred_fallthru
          _
      $region12: #{tpu_custom_call.1} parent=5 // pred_fallthru
        _
      %p220 = scmp.lt.s32.totalorder %s15, 2
      // Predicated region
      $region29: #{tpu_custom_call.1} parent=5 // pred_check
        %p221 = pneg %p220
      $region30: #{tpu_custom_call.1} parent=5 // pred_check_branch
        %223 = sbr.rel (%p221) target = $region32
      $region31: #{tpu_custom_call.1} parent=5 // pred_region
        // Predicated region
        $region33: #{tpu_custom_call.1} parent=31 // pred_check
          %p224 = pneg %p49
        $region34: #{tpu_custom_call.1} parent=31 // pred_check_branch
          %226 = sbr.rel (%p224) target = $region36
        $region35: #{tpu_custom_call.1} parent=31 // pred_region
          %s227 = sadd.s32 %s22, %s23
          %s228 = smul.u32 48, %s227
          %p229 = scmp.lt.s32.totalorder %s228, 95
          %s230 = scalar_select %p229, %s228, 95
          %s231 = smul.addr %s230, 8
          %s232 = scalar_lea.vmem %s0, %s231
          %s233 = sadd.s32 %s22, %s23
          %s234 = smul.u32 48, %s233
        $region36: #{tpu_custom_call.1} parent=31 // pred_fallthru
          _
        // Predicated region
        $region37: #{tpu_custom_call.1} parent=31 // pred_check
          %p235 = pneg %p161
        $region38: #{tpu_custom_call.1} parent=31 // pred_check_branch
          %237 = sbr.rel (%p235) target = $region40
        $region39: #{tpu_custom_call.1} parent=31 // pred_region
          %s238 = sadd.s32 %s22, %s23
          %s239 = smul.u32 3, %s238
          %p240 = scmp.lt.s32.totalorder %s239, 5
          %s241 = scalar_select %p240, %s239, 5
          %s242 = scalar_lea.vmem %s5, %s241
          %s243 = sadd.s32 %s22, %s23
          %s244 = smul.u32 3, %s243
        $region40: #{tpu_custom_call.1} parent=31 // pred_fallthru
          _
      $region32: #{tpu_custom_call.1} parent=5 // pred_fallthru
        _
      %p245 = scmp.le.s32.totalorder 1, %s15
      %p246 = scmp.lt.s32.totalorder %s15, 3
      %p247 = pnand %p245, %p246
      %p248 = pneg %p247
      // Predicated region
      $region41: #{tpu_custom_call.1} parent=5 // pred_check
        _
      $region42: #{tpu_custom_call.1} parent=5 // pred_check_branch
        %250 = sbr.rel (%p247) target = $region44
      $region43: #{tpu_custom_call.1} parent=5 // pred_region
        %s251 = ssub.s32 %s15, 1
        %s252 = sadd.s32 %s24, %s25
        %s253 = smul.u32 48, %s252
        %p254 = scmp.lt.s32.totalorder %s253, 95
        %s255 = scalar_select %p254, %s253, 95
        %s256 = smul.addr %s255, 8
        %s257 = scalar_lea.vmem %s0, %s256
        %p258 = pneg %p55
        %p259 = pneg %p52
        %p260 = pneg %p76
        %p261 = pneg %p73
        %p262 = pneg %p97
        %p263 = pneg %p94
        %p264 = pneg %p118
        %p265 = pneg %p115
        %p266 = pneg %p139
        %p267 = pneg %p136
        %s268 = sadd.s32 %s24, %s25
        %s269 = smul.u32 3, %s268
        %p270 = scmp.lt.s32.totalorder %s269, 5
        %s271 = scalar_select %p270, %s269, 5
        %s272 = scalar_lea.vmem %s5, %s271
        %p273 = pneg %p167
        %p274 = pneg %p164
        %p275 = pneg %p193
        %p276 = pneg %p190
        %s277 = sand.u32 %s180, 1
        %s278 = scalar_lea.sflag [#allocation3], %s277
        %s279 = sand.u32 %s180, 1
        %s280 = smul.addr %s279, 8
        %s281 = scalar_lea.vmem [#allocation2], %s280
        %s282 = sadd.s32 %s24, %s25
        %s283 = smul.u32 48, %s282
        %p284 = scmp.lt.s32.totalorder %s283, 95
        %s285 = scalar_select %p284, %s283, 95
        %s286 = smul.addr %s285, 8
        %s287 = scalar_lea.vmem %s0, %s286
        %s288 = sadd.s32 %s24, %s25
        %s289 = smul.u32 48, %s288
        %s290 = sadd.s32 %s24, %s25
        %s291 = smul.u32 3, %s290
        %p292 = scmp.lt.s32.totalorder %s291, 5
        %s293 = scalar_select %p292, %s291, 5
        %s294 = scalar_lea.vmem %s5, %s293
        %s295 = sadd.s32 %s24, %s25
        %s296 = smul.u32 3, %s295
        %p298 = scmp.eq.s32.totalorder %s25, 0
        // Predicated region
        $region45: #{tpu_custom_call.1} parent=43 // pred_check
          %p299 = pneg %p298
        $region46: #{tpu_custom_call.1} parent=43 // pred_check_branch
          %301 = sbr.rel (%p299) target = $region48
        $region47: #{tpu_custom_call.1} parent=43 // pred_region
          %302 = vst [vmem:[%s281] sm:$0xff] 0.0
        $region48: #{tpu_custom_call.1} parent=43 // pred_fallthru
          _
        %v303 = vld [vmem:[%s287] sm:$0xff]
        %v304 = vld [vmem:[%s287 + $0x8] sm:$0xff]
        %v305 = vld [vmem:[%s287 + $0x10] sm:$0xff]
        %v306 = vld [vmem:[%s287 + $0x18] sm:$0xff]
        %v307 = vld [vmem:[%s287 + $0x20] sm:$0xff]
        %v308 = vld [vmem:[%s287 + $0x28] sm:$0xff]
        %v309 = vld [vmem:[%s287 + $0x30] sm:$0xff]
        %v310 = vld [vmem:[%s287 + $0x38] sm:$0xff]
        %v311 = vld [vmem:[%s287 + $0x40] sm:$0xff]
        %v312 = vld [vmem:[%s287 + $0x48] sm:$0xff]
        %v313 = vld [vmem:[%s287 + $0x50] sm:$0xff]
        %v314 = vld [vmem:[%s287 + $0x58] sm:$0xff]
        %v315 = vld [vmem:[%s287 + $0x60] sm:$0xff]
        %v316 = vld [vmem:[%s287 + $0x68] sm:$0xff]
        %v317 = vld [vmem:[%s287 + $0x70] sm:$0xff]
        %v318 = vld [vmem:[%s287 + $0x78] sm:$0xff]
        %v319 = vld [vmem:[%s287 + $0x80] sm:$0xff]
        %v320 = vld [vmem:[%s287 + $0x88] sm:$0xff]
        %v321 = vld [vmem:[%s287 + $0x90] sm:$0xff]
        %v322 = vld [vmem:[%s287 + $0x98] sm:$0xff]
        %v323 = vld [vmem:[%s287 + $0xa0] sm:$0xff]
        %v324 = vld [vmem:[%s287 + $0xa8] sm:$0xff]
        %v325 = vld [vmem:[%s287 + $0xb0] sm:$0xff]
        %v326 = vld [vmem:[%s287 + $0xb8] sm:$0xff]
        %v327 = vld [vmem:[%s287 + $0xc0] sm:$0xff]
        %v328 = vld [vmem:[%s287 + $0xc8] sm:$0xff]
        %v329 = vld [vmem:[%s287 + $0xd0] sm:$0xff]
        %v330 = vld [vmem:[%s287 + $0xd8] sm:$0xff]
        %v331 = vld [vmem:[%s287 + $0xe0] sm:$0xff]
        %v332 = vld [vmem:[%s287 + $0xe8] sm:$0xff]
        %v333 = vld [vmem:[%s287 + $0xf0] sm:$0xff]
        %v334 = vld [vmem:[%s287 + $0xf8] sm:$0xff]
        %v335 = vld [vmem:[%s287 + $0x100] sm:$0xff]
        %v336 = vld [vmem:[%s287 + $0x108] sm:$0xff]
        %v337 = vld [vmem:[%s287 + $0x110] sm:$0xff]
        %v338 = vld [vmem:[%s287 + $0x118] sm:$0xff]
        %v339 = vld [vmem:[%s287 + $0x120] sm:$0xff]
        %v340 = vld [vmem:[%s287 + $0x128] sm:$0xff]
        %v341 = vld [vmem:[%s287 + $0x130] sm:$0xff]
        %v342 = vld [vmem:[%s287 + $0x138] sm:$0xff]
        %v343 = vld [vmem:[%s287 + $0x140] sm:$0xff]
        %v344 = vld [vmem:[%s287 + $0x148] sm:$0xff]
        %v345 = vld [vmem:[%s287 + $0x150] sm:$0xff]
        %v346 = vld [vmem:[%s287 + $0x158] sm:$0xff]
        %v347 = vld [vmem:[%s287 + $0x160] sm:$0xff]
        %v348 = vld [vmem:[%s287 + $0x168] sm:$0xff]
        %v349 = vld [vmem:[%s287 + $0x170] sm:$0xff]
        %v350 = vld [vmem:[%s287 + $0x178] sm:$0xff]
        %v351 = vpack.c.bf16 %v304, %v303
        %v352 = vpack.c.bf16 %v306, %v305
        %v353 = vpack.c.bf16 %v308, %v307
        %v354 = vpack.c.bf16 %v310, %v309
        %v355 = vpack.c.bf16 %v312, %v311
        %v356 = vpack.c.bf16 %v314, %v313
        %v357 = vpack.c.bf16 %v316, %v315
        %v358 = vpack.c.bf16 %v318, %v317
        %v359 = vpack.c.bf16 %v320, %v319
        %v360 = vpack.c.bf16 %v322, %v321
        %v361 = vpack.c.bf16 %v324, %v323
        %v362 = vpack.c.bf16 %v326, %v325
        %v363 = vpack.c.bf16 %v328, %v327
        %v364 = vpack.c.bf16 %v330, %v329
        %v365 = vpack.c.bf16 %v332, %v331
        %v366 = vpack.c.bf16 %v334, %v333
        %v367 = vpack.c.bf16 %v336, %v335
        %v368 = vpack.c.bf16 %v338, %v337
        %v369 = vpack.c.bf16 %v340, %v339
        %v370 = vpack.c.bf16 %v342, %v341
        %v371 = vpack.c.bf16 %v344, %v343
        %v372 = vpack.c.bf16 %v346, %v345
        %v373 = vpack.c.bf16 %v348, %v347
        %v374 = vpack.c.bf16 %v350, %v349
        %v375 = vld [vmem:[%s1] sm:$0xf]
        %v376 = vld [vmem:[%s1 + $0x4] sm:$0xf]
        %v377 = vld [vmem:[%s1 + $0x8] sm:$0xf]
        %v378 = vld [vmem:[%s1 + $0xc] sm:$0xf]
        %v379 = vld [vmem:[%s1 + $0x10] sm:$0xf]
        %v380 = vld [vmem:[%s1 + $0x14] sm:$0xf]
        %v381 = vld [vmem:[%s2] sm:$0x1]
        %v383 = vlaneseq
        %v384 = vshrl.u32 %v383, 7
        %v385 = vsub.s32 0, %v384
        %v386 = vrot.slane %v381, %v385
        %v394 = vunpack.c.l.b16 %v375
        %v395 = vunpack.c.l.b16 %v376
        %v396 = vunpack.c.l.b16 %v377
        %v397 = vunpack.c.l.b16 %v378
        %v398 = vunpack.c.l.b16 %v379
        %v399 = vunpack.c.l.b16 %v380
        %v400 = vpack.c.b16 %v395, %v394
        %v401 = vpack.c.b16 %v397, %v396
        %v402 = vpack.c.b16 %v399, %v398
        %vm406 = vcmask 392192
        %v408 = vsel %vm406, %v351, 0
        %v411 = vsel %vm406, %v352, 0
        %v414 = vsel %vm406, %v353, 0
        %v417 = vsel %vm406, %v354, 0
        %v420 = vsel %vm406, %v355, 0
        %v423 = vsel %vm406, %v356, 0
        %v426 = vsel %vm406, %v357, 0
        %v429 = vsel %vm406, %v358, 0
        %v432 = vsel %vm406, %v359, 0
        %v435 = vsel %vm406, %v360, 0
        %v438 = vsel %vm406, %v361, 0
        %v441 = vsel %vm406, %v362, 0
        %v444 = vsel %vm406, %v363, 0
        %v447 = vsel %vm406, %v364, 0
        %v450 = vsel %vm406, %v365, 0
        %v453 = vsel %vm406, %v366, 0
        %v456 = vsel %vm406, %v367, 0
        %v459 = vsel %vm406, %v368, 0
        %v462 = vsel %vm406, %v369, 0
        %v465 = vsel %vm406, %v370, 0
        %v468 = vsel %vm406, %v371, 0
        %v471 = vsel %vm406, %v372, 0
        %v474 = vsel %vm406, %v373, 0
        %v477 = vsel %vm406, %v374, 0
        %479 = vmatprep.subr.bf16.mxu0 0
        %480 = vmatpush1.bf16.msra.mxu0 %v400
        %481 = vmatprep.subr.bf16.mxu0 0
        %482 = vmatpush1.bf16.msra.mxu0 %v401
        %483 = vmatprep.subr.bf16.mxu0 0
        %484 = vmatpush1.bf16.msra.mxu0 %v402
        %485 = vmatprep.subr.bf16.mxu0 0
        %486 = vmatpush1.bf16.msra.mxu0 0
        %487 = vmatprep.subr.bf16.mxu0 0
        %488 = vmatpush1.bf16.msra.mxu0 0
        %489 = vmatprep.subr.bf16.mxu0 0
        %490 = vmatpush1.bf16.msra.mxu0 0
        %491 = vmatprep.subr.bf16.mxu0 0
        %492 = vmatpush1.bf16.msra.mxu0 0
        %493 = vmatprep.subr.bf16.mxu0 0
        %494 = vmatpush1.bf16.msra.mxu0 0
        %495 = vmatprep.subr.bf16.mxu0 0
        %496 = vmatpush1.bf16.msra.mxu0 0
        %497 = vmatprep.subr.bf16.mxu0 0
        %498 = vmatpush1.bf16.msra.mxu0 0
        %499 = vmatprep.subr.bf16.mxu0 0
        %500 = vmatpush1.bf16.msra.mxu0 0
        %501 = vmatprep.subr.bf16.mxu0 0
        %502 = vmatpush1.bf16.msra.mxu0 0
        %503 = vmatprep.subr.bf16.mxu0 0
        %504 = vmatpush1.bf16.msra.mxu0 0
        %505 = vmatprep.subr.bf16.mxu0 0
        %506 = vmatpush1.bf16.msra.mxu0 0
        %507 = vmatprep.subr.bf16.mxu0 0
        %508 = vmatpush1.bf16.msra.mxu0 0
        %509 = vmatprep.subr.bf16.mxu0 0
        %510 = vmatpush1.bf16.msra.mxu0 0
        %511 = vmatprep.mubr.bf16.mxu0 0
        %512 = vmatmul.mubr.bf16.gmra.mrb[0].mxu0 %v408
        %v513 = vpop.f32.mrb[0].mxu0
        %v514 = vadd.f32 %v386, %v513
        %v515 = vpop.f32.mrb[0].mxu0
        %v516 = vpop.f32.mrb[0].mxu0
        %v517 = vadd.f32 %v386, %v516
        %v518 = vpop.f32.mrb[0].mxu0
        %519 = vmatprep.mubr.bf16.mxu0 0
        %520 = vmatmul.mubr.bf16.gmra.mrb[0].mxu0 %v411
        %v521 = vpop.f32.mrb[0].mxu0
        %v522 = vadd.f32 %v386, %v521
        %v523 = vpop.f32.mrb[0].mxu0
        %v524 = vpop.f32.mrb[0].mxu0
        %v525 = vadd.f32 %v386, %v524
        %v526 = vpop.f32.mrb[0].mxu0
        %527 = vmatprep.mubr.bf16.mxu0 0
        %528 = vmatmul.mubr.bf16.gmra.mrb[0].mxu0 %v414
        %v529 = vpop.f32.mrb[0].mxu0
        %v530 = vadd.f32 %v386, %v529
        %v531 = vpop.f32.mrb[0].mxu0
        %v532 = vpop.f32.mrb[0].mxu0
        %v533 = vadd.f32 %v386, %v532
        %v534 = vpop.f32.mrb[0].mxu0
        %535 = vmatprep.mubr.bf16.mxu0 0
        %536 = vmatmul.mubr.bf16.gmra.mrb[0].mxu0 %v417
        %v537 = vpop.f32.mrb[0].mxu0
        %v538 = vadd.f32 %v386, %v537
        %v539 = vpop.f32.mrb[0].mxu0
        %v540 = vpop.f32.mrb[0].mxu0
        %v541 = vadd.f32 %v386, %v540
        %v542 = vpop.f32.mrb[0].mxu0
        %543 = vmatprep.mubr.bf16.mxu0 0
        %544 = vmatmul.mubr.bf16.gmra.mrb[0].mxu0 %v420
        %v545 = vpop.f32.mrb[0].mxu0
        %v546 = vadd.f32 %v386, %v545
        %v547 = vpop.f32.mrb[0].mxu0
        %v548 = vpop.f32.mrb[0].mxu0
        %v549 = vadd.f32 %v386, %v548
        %v550 = vpop.f32.mrb[0].mxu0
        %551 = vmatprep.mubr.bf16.mxu0 0
        %552 = vmatmul.mubr.bf16.gmra.mrb[0].mxu0 %v423
        %v553 = vpop.f32.mrb[0].mxu0
        %v554 = vadd.f32 %v386, %v553
        %v555 = vpop.f32.mrb[0].mxu0
        %v556 = vpop.f32.mrb[0].mxu0
        %v557 = vadd.f32 %v386, %v556
        %v558 = vpop.f32.mrb[0].mxu0
        %559 = vmatprep.mubr.bf16.mxu0 0
        %560 = vmatmul.mubr.bf16.gmra.mrb[0].mxu0 %v426
        %v561 = vpop.f32.mrb[0].mxu0
        %v562 = vadd.f32 %v386, %v561
        %v563 = vpop.f32.mrb[0].mxu0
        %v564 = vpop.f32.mrb[0].mxu0
        %v565 = vadd.f32 %v386, %v564
        %v566 = vpop.f32.mrb[0].mxu0
        %567 = vmatprep.mubr.bf16.mxu0 0
        %568 = vmatmul.mubr.bf16.gmra.mrb[0].mxu0 %v429
        %v569 = vpop.f32.mrb[0].mxu0
        %v570 = vadd.f32 %v386, %v569
        %v571 = vpop.f32.mrb[0].mxu0
        %v572 = vpop.f32.mrb[0].mxu0
        %v573 = vadd.f32 %v386, %v572
        %v574 = vpop.f32.mrb[0].mxu0
        %575 = vmatprep.mubr.bf16.mxu0 0
        %576 = vmatmul.mubr.bf16.gmra.mrb[0].mxu0 %v432
        %v577 = vpop.f32.mrb[0].mxu0
        %v578 = vadd.f32 %v386, %v577
        %v579 = vpop.f32.mrb[0].mxu0
        %v580 = vpop.f32.mrb[0].mxu0
        %v581 = vadd.f32 %v386, %v580
        %v582 = vpop.f32.mrb[0].mxu0
        %583 = vmatprep.mubr.bf16.mxu0 0
        %584 = vmatmul.mubr.bf16.gmra.mrb[0].mxu0 %v435
        %v585 = vpop.f32.mrb[0].mxu0
        %v586 = vadd.f32 %v386, %v585
        %v587 = vpop.f32.mrb[0].mxu0
        %v588 = vpop.f32.mrb[0].mxu0
        %v589 = vadd.f32 %v386, %v588
        %v590 = vpop.f32.mrb[0].mxu0
        %591 = vmatprep.mubr.bf16.mxu0 0
        %592 = vmatmul.mubr.bf16.gmra.mrb[0].mxu0 %v438
        %v593 = vpop.f32.mrb[0].mxu0
        %v594 = vadd.f32 %v386, %v593
        %v595 = vpop.f32.mrb[0].mxu0
        %v596 = vpop.f32.mrb[0].mxu0
        %v597 = vadd.f32 %v386, %v596
        %v598 = vpop.f32.mrb[0].mxu0
        %599 = vmatprep.mubr.bf16.mxu0 0
        %600 = vmatmul.mubr.bf16.gmra.mrb[0].mxu0 %v441
        %v601 = vpop.f32.mrb[0].mxu0
        %v602 = vadd.f32 %v386, %v601
        %v603 = vpop.f32.mrb[0].mxu0
        %v604 = vpop.f32.mrb[0].mxu0
        %v605 = vadd.f32 %v386, %v604
        %v606 = vpop.f32.mrb[0].mxu0
        %607 = vmatprep.mubr.bf16.mxu0 0
        %608 = vmatmul.mubr.bf16.gmra.mrb[0].mxu0 %v444
        %v609 = vpop.f32.mrb[0].mxu0
        %v610 = vadd.f32 %v386, %v609
        %v611 = vpop.f32.mrb[0].mxu0
        %v612 = vpop.f32.mrb[0].mxu0
        %v613 = vadd.f32 %v386, %v612
        %v614 = vpop.f32.mrb[0].mxu0
        %615 = vmatprep.mubr.bf16.mxu0 0
        %616 = vmatmul.mubr.bf16.gmra.mrb[0].mxu0 %v447
        %v617 = vpop.f32.mrb[0].mxu0
        %v618 = vadd.f32 %v386, %v617
        %v619 = vpop.f32.mrb[0].mxu0
        %v620 = vpop.f32.mrb[0].mxu0
        %v621 = vadd.f32 %v386, %v620
        %v622 = vpop.f32.mrb[0].mxu0
        %623 = vmatprep.mubr.bf16.mxu0 0
        %624 = vmatmul.mubr.bf16.gmra.mrb[0].mxu0 %v450
        %v625 = vpop.f32.mrb[0].mxu0
        %v626 = vadd.f32 %v386, %v625
        %v627 = vpop.f32.mrb[0].mxu0
        %v628 = vpop.f32.mrb[0].mxu0
        %v629 = vadd.f32 %v386, %v628
        %v630 = vpop.f32.mrb[0].mxu0
        %631 = vmatprep.mubr.bf16.mxu0 0
        %632 = vmatmul.mubr.bf16.gmra.mrb[0].mxu0 %v453
        %v633 = vpop.f32.mrb[0].mxu0
        %v634 = vadd.f32 %v386, %v633
        %v635 = vpop.f32.mrb[0].mxu0
        %v636 = vpop.f32.mrb[0].mxu0
        %v637 = vadd.f32 %v386, %v636
        %v638 = vpop.f32.mrb[0].mxu0
        %639 = vmatprep.mubr.bf16.mxu0 0
        %640 = vmatmul.mubr.bf16.gmra.mrb[0].mxu0 %v456
        %v641 = vpop.f32.mrb[0].mxu0
        %v642 = vadd.f32 %v386, %v641
        %v643 = vpop.f32.mrb[0].mxu0
        %v644 = vpop.f32.mrb[0].mxu0
        %v645 = vadd.f32 %v386, %v644
        %v646 = vpop.f32.mrb[0].mxu0
        %647 = vmatprep.mubr.bf16.mxu0 0
        %648 = vmatmul.mubr.bf16.gmra.mrb[0].mxu0 %v459
        %v649 = vpop.f32.mrb[0].mxu0
        %v650 = vadd.f32 %v386, %v649
        %v651 = vpop.f32.mrb[0].mxu0
        %v652 = vpop.f32.mrb[0].mxu0
        %v653 = vadd.f32 %v386, %v652
        %v654 = vpop.f32.mrb[0].mxu0
        %655 = vmatprep.mubr.bf16.mxu0 0
        %656 = vmatmul.mubr.bf16.gmra.mrb[0].mxu0 %v462
        %v657 = vpop.f32.mrb[0].mxu0
        %v658 = vadd.f32 %v386, %v657
        %v659 = vpop.f32.mrb[0].mxu0
        %v660 = vpop.f32.mrb[0].mxu0
        %v661 = vadd.f32 %v386, %v660
        %v662 = vpop.f32.mrb[0].mxu0
        %663 = vmatprep.mubr.bf16.mxu0 0
        %664 = vmatmul.mubr.bf16.gmra.mrb[0].mxu0 %v465
        %v665 = vpop.f32.mrb[0].mxu0
        %v666 = vadd.f32 %v386, %v665
        %v667 = vpop.f32.mrb[0].mxu0
        %v668 = vpop.f32.mrb[0].mxu0
        %v669 = vadd.f32 %v386, %v668
        %v670 = vpop.f32.mrb[0].mxu0
        %671 = vmatprep.mubr.bf16.mxu0 0
        %672 = vmatmul.mubr.bf16.gmra.mrb[0].mxu0 %v468
        %v673 = vpop.f32.mrb[0].mxu0
        %v674 = vadd.f32 %v386, %v673
        %v675 = vpop.f32.mrb[0].mxu0
        %v676 = vpop.f32.mrb[0].mxu0
        %v677 = vadd.f32 %v386, %v676
        %v678 = vpop.f32.mrb[0].mxu0
        %679 = vmatprep.mubr.bf16.mxu0 0
        %680 = vmatmul.mubr.bf16.gmra.mrb[0].mxu0 %v471
        %v681 = vpop.f32.mrb[0].mxu0
        %v682 = vadd.f32 %v386, %v681
        %v683 = vpop.f32.mrb[0].mxu0
        %v684 = vpop.f32.mrb[0].mxu0
        %v685 = vadd.f32 %v386, %v684
        %v686 = vpop.f32.mrb[0].mxu0
        %687 = vmatprep.mubr.bf16.mxu0 0
        %688 = vmatmul.mubr.bf16.gmra.mrb[0].mxu0 %v474
        %v689 = vpop.f32.mrb[0].mxu0
        %v690 = vadd.f32 %v386, %v689
        %v691 = vpop.f32.mrb[0].mxu0
        %v692 = vpop.f32.mrb[0].mxu0
        %v693 = vadd.f32 %v386, %v692
        %v694 = vpop.f32.mrb[0].mxu0
        %695 = vmatprep.mubr.bf16.mxu0 0
        %696 = vmatmul.mubr.bf16.gmra.mrb[0].mxu0 %v477
        %v697 = vpop.f32.mrb[0].mxu0
        %v698 = vadd.f32 %v386, %v697
        %v699 = vpop.f32.mrb[0].mxu0
        %v700 = vpop.f32.mrb[0].mxu0
        %v701 = vadd.f32 %v386, %v700
        %v702 = vpop.f32.mrb[0].mxu0
        %703 = vdwg.mxu0
        %704 = vadd.xlane.f32.xlu0 %v514
        %v705 = vpop.xlane.xlu0 %704
        %706 = vadd.xlane.f32.xlu0 %v517
        %v707 = vpop.xlane.xlu0 %706
        %708 = vadd.xlane.f32.xlu0 %v522
        %v709 = vpop.xlane.xlu0 %708
        %710 = vadd.xlane.f32.xlu0 %v525
        %v711 = vpop.xlane.xlu0 %710
        %712 = vadd.xlane.f32.xlu0 %v530
        %v713 = vpop.xlane.xlu0 %712
        %714 = vadd.xlane.f32.xlu0 %v533
        %v715 = vpop.xlane.xlu0 %714
        %716 = vadd.xlane.f32.xlu0 %v538
        %v717 = vpop.xlane.xlu0 %716
        %718 = vadd.xlane.f32.xlu0 %v541
        %v719 = vpop.xlane.xlu0 %718
        %720 = vadd.xlane.f32.xlu0 %v546
        %v721 = vpop.xlane.xlu0 %720
        %722 = vadd.xlane.f32.xlu0 %v549
        %v723 = vpop.xlane.xlu0 %722
        %724 = vadd.xlane.f32.xlu0 %v554
        %v725 = vpop.xlane.xlu0 %724
        %726 = vadd.xlane.f32.xlu0 %v557
        %v727 = vpop.xlane.xlu0 %726
        %728 = vadd.xlane.f32.xlu0 %v562
        %v729 = vpop.xlane.xlu0 %728
        %730 = vadd.xlane.f32.xlu0 %v565
        %v731 = vpop.xlane.xlu0 %730
        %732 = vadd.xlane.f32.xlu0 %v570
        %v733 = vpop.xlane.xlu0 %732
        %734 = vadd.xlane.f32.xlu0 %v573
        %v735 = vpop.xlane.xlu0 %734
        %736 = vadd.xlane.f32.xlu0 %v578
        %v737 = vpop.xlane.xlu0 %736
        %738 = vadd.xlane.f32.xlu0 %v581
        %v739 = vpop.xlane.xlu0 %738
        %740 = vadd.xlane.f32.xlu0 %v586
        %v741 = vpop.xlane.xlu0 %740
        %742 = vadd.xlane.f32.xlu0 %v589
        %v743 = vpop.xlane.xlu0 %742
        %744 = vadd.xlane.f32.xlu0 %v594
        %v745 = vpop.xlane.xlu0 %744
        %746 = vadd.xlane.f32.xlu0 %v597
        %v747 = vpop.xlane.xlu0 %746
        %748 = vadd.xlane.f32.xlu0 %v602
        %v749 = vpop.xlane.xlu0 %748
        %750 = vadd.xlane.f32.xlu0 %v605
        %v751 = vpop.xlane.xlu0 %750
        %752 = vadd.xlane.f32.xlu0 %v610
        %v753 = vpop.xlane.xlu0 %752
        %754 = vadd.xlane.f32.xlu0 %v613
        %v755 = vpop.xlane.xlu0 %754
        %756 = vadd.xlane.f32.xlu0 %v618
        %v757 = vpop.xlane.xlu0 %756
        %758 = vadd.xlane.f32.xlu0 %v621
        %v759 = vpop.xlane.xlu0 %758
        %760 = vadd.xlane.f32.xlu0 %v626
        %v761 = vpop.xlane.xlu0 %760
        %762 = vadd.xlane.f32.xlu0 %v629
        %v763 = vpop.xlane.xlu0 %762
        %764 = vadd.xlane.f32.xlu0 %v634
        %v765 = vpop.xlane.xlu0 %764
        %766 = vadd.xlane.f32.xlu0 %v637
        %v767 = vpop.xlane.xlu0 %766
        %768 = vadd.xlane.f32.xlu0 %v642
        %v769 = vpop.xlane.xlu0 %768
        %770 = vadd.xlane.f32.xlu0 %v645
        %v771 = vpop.xlane.xlu0 %770
        %772 = vadd.xlane.f32.xlu0 %v650
        %v773 = vpop.xlane.xlu0 %772
        %774 = vadd.xlane.f32.xlu0 %v653
        %v775 = vpop.xlane.xlu0 %774
        %776 = vadd.xlane.f32.xlu0 %v658
        %v777 = vpop.xlane.xlu0 %776
        %778 = vadd.xlane.f32.xlu0 %v661
        %v779 = vpop.xlane.xlu0 %778
        %780 = vadd.xlane.f32.xlu0 %v666
        %v781 = vpop.xlane.xlu0 %780
        %782 = vadd.xlane.f32.xlu0 %v669
        %v783 = vpop.xlane.xlu0 %782
        %784 = vadd.xlane.f32.xlu0 %v674
        %v785 = vpop.xlane.xlu0 %784
        %786 = vadd.xlane.f32.xlu0 %v677
        %v787 = vpop.xlane.xlu0 %786
        %788 = vadd.xlane.f32.xlu0 %v682
        %v789 = vpop.xlane.xlu0 %788
        %790 = vadd.xlane.f32.xlu0 %v685
        %v791 = vpop.xlane.xlu0 %790
        %792 = vadd.xlane.f32.xlu0 %v690
        %v793 = vpop.xlane.xlu0 %792
        %794 = vadd.xlane.f32.xlu0 %v693
        %v795 = vpop.xlane.xlu0 %794
        %796 = vadd.xlane.f32.xlu0 %v698
        %v797 = vpop.xlane.xlu0 %796
        %798 = vadd.xlane.f32.xlu0 %v701
        %v799 = vpop.xlane.xlu0 %798
        %v800 = vmul.f32 %v705, 0.03125
        %v801 = vmul.f32 %v707, 0.03125
        %v802 = vmul.f32 %v709, 0.03125
        %v803 = vmul.f32 %v711, 0.03125
        %v804 = vmul.f32 %v713, 0.03125
        %v805 = vmul.f32 %v715, 0.03125
        %v806 = vmul.f32 %v717, 0.03125
        %v807 = vmul.f32 %v719, 0.03125
        %v808 = vmul.f32 %v721, 0.03125
        %v809 = vmul.f32 %v723, 0.03125
        %v810 = vmul.f32 %v725, 0.03125
        %v811 = vmul.f32 %v727, 0.03125
        %v812 = vmul.f32 %v729, 0.03125
        %v813 = vmul.f32 %v731, 0.03125
        %v814 = vmul.f32 %v733, 0.03125
        %v815 = vmul.f32 %v735, 0.03125
        %v816 = vmul.f32 %v737, 0.03125
        %v817 = vmul.f32 %v739, 0.03125
        %v818 = vmul.f32 %v741, 0.03125
        %v819 = vmul.f32 %v743, 0.03125
        %v820 = vmul.f32 %v745, 0.03125
        %v821 = vmul.f32 %v747, 0.03125
        %v822 = vmul.f32 %v749, 0.03125
        %v823 = vmul.f32 %v751, 0.03125
        %v824 = vmul.f32 %v753, 0.03125
        %v825 = vmul.f32 %v755, 0.03125
        %v826 = vmul.f32 %v757, 0.03125
        %v827 = vmul.f32 %v759, 0.03125
        %v828 = vmul.f32 %v761, 0.03125
        %v829 = vmul.f32 %v763, 0.03125
        %v830 = vmul.f32 %v765, 0.03125
        %v831 = vmul.f32 %v767, 0.03125
        %v832 = vmul.f32 %v769, 0.03125
        %v833 = vmul.f32 %v771, 0.03125
        %v834 = vmul.f32 %v773, 0.03125
        %v835 = vmul.f32 %v775, 0.03125
        %v836 = vmul.f32 %v777, 0.03125
        %v837 = vmul.f32 %v779, 0.03125
        %v838 = vmul.f32 %v781, 0.03125
        %v839 = vmul.f32 %v783, 0.03125
        %v840 = vmul.f32 %v785, 0.03125
        %v841 = vmul.f32 %v787, 0.03125
        %v842 = vmul.f32 %v789, 0.03125
        %v843 = vmul.f32 %v791, 0.03125
        %v844 = vmul.f32 %v793, 0.03125
        %v845 = vmul.f32 %v795, 0.03125
        %v846 = vmul.f32 %v797, 0.03125
        %v847 = vmul.f32 %v799, 0.03125
        %v848 = vmul.f32 %v514, %v514
        %v849 = vmul.f32 %v517, %v517
        %v850 = vmul.f32 %v522, %v522
        %v851 = vmul.f32 %v525, %v525
        %v852 = vmul.f32 %v530, %v530
        %v853 = vmul.f32 %v533, %v533
        %v854 = vmul.f32 %v538, %v538
        %v855 = vmul.f32 %v541, %v541
        %v856 = vmul.f32 %v546, %v546
        %v857 = vmul.f32 %v549, %v549
        %v858 = vmul.f32 %v554, %v554
        %v859 = vmul.f32 %v557, %v557
        %v860 = vmul.f32 %v562, %v562
        %v861 = vmul.f32 %v565, %v565
        %v862 = vmul.f32 %v570, %v570
        %v863 = vmul.f32 %v573, %v573
        %v864 = vmul.f32 %v578, %v578
        %v865 = vmul.f32 %v581, %v581
        %v866 = vmul.f32 %v586, %v586
        %v867 = vmul.f32 %v589, %v589
        %v868 = vmul.f32 %v594, %v594
        %v869 = vmul.f32 %v597, %v597
        %v870 = vmul.f32 %v602, %v602
        %v871 = vmul.f32 %v605, %v605
        %v872 = vmul.f32 %v610, %v610
        %v873 = vmul.f32 %v613, %v613
        %v874 = vmul.f32 %v618, %v618
        %v875 = vmul.f32 %v621, %v621
        %v876 = vmul.f32 %v626, %v626
        %v877 = vmul.f32 %v629, %v629
        %v878 = vmul.f32 %v634, %v634
        %v879 = vmul.f32 %v637, %v637
        %v880 = vmul.f32 %v642, %v642
        %v881 = vmul.f32 %v645, %v645
        %v882 = vmul.f32 %v650, %v650
        %v883 = vmul.f32 %v653, %v653
        %v884 = vmul.f32 %v658, %v658
        %v885 = vmul.f32 %v661, %v661
        %v886 = vmul.f32 %v666, %v666
        %v887 = vmul.f32 %v669, %v669
        %v888 = vmul.f32 %v674, %v674
        %v889 = vmul.f32 %v677, %v677
        %v890 = vmul.f32 %v682, %v682
        %v891 = vmul.f32 %v685, %v685
        %v892 = vmul.f32 %v690, %v690
        %v893 = vmul.f32 %v693, %v693
        %v894 = vmul.f32 %v698, %v698
        %v895 = vmul.f32 %v701, %v701
        %896 = vadd.xlane.f32.xlu0 %v848
        %v897 = vpop.xlane.xlu0 %896
        %898 = vadd.xlane.f32.xlu0 %v849
        %v899 = vpop.xlane.xlu0 %898
        %900 = vadd.xlane.f32.xlu0 %v850
        %v901 = vpop.xlane.xlu0 %900
        %902 = vadd.xlane.f32.xlu0 %v851
        %v903 = vpop.xlane.xlu0 %902
        %904 = vadd.xlane.f32.xlu0 %v852
        %v905 = vpop.xlane.xlu0 %904
        %906 = vadd.xlane.f32.xlu0 %v853
        %v907 = vpop.xlane.xlu0 %906
        %908 = vadd.xlane.f32.xlu0 %v854
        %v909 = vpop.xlane.xlu0 %908
        %910 = vadd.xlane.f32.xlu0 %v855
        %v911 = vpop.xlane.xlu0 %910
        %912 = vadd.xlane.f32.xlu0 %v856
        %v913 = vpop.xlane.xlu0 %912
        %914 = vadd.xlane.f32.xlu0 %v857
        %v915 = vpop.xlane.xlu0 %914
        %916 = vadd.xlane.f32.xlu0 %v858
        %v917 = vpop.xlane.xlu0 %916
        %918 = vadd.xlane.f32.xlu0 %v859
        %v919 = vpop.xlane.xlu0 %918
        %920 = vadd.xlane.f32.xlu0 %v860
        %v921 = vpop.xlane.xlu0 %920
        %922 = vadd.xlane.f32.xlu0 %v861
        %v923 = vpop.xlane.xlu0 %922
        %924 = vadd.xlane.f32.xlu0 %v862
        %v925 = vpop.xlane.xlu0 %924
        %926 = vadd.xlane.f32.xlu0 %v863
        %v927 = vpop.xlane.xlu0 %926
        %928 = vadd.xlane.f32.xlu0 %v864
        %v929 = vpop.xlane.xlu0 %928
        %930 = vadd.xlane.f32.xlu0 %v865
        %v931 = vpop.xlane.xlu0 %930
        %932 = vadd.xlane.f32.xlu0 %v866
        %v933 = vpop.xlane.xlu0 %932
        %934 = vadd.xlane.f32.xlu0 %v867
        %v935 = vpop.xlane.xlu0 %934
        %936 = vadd.xlane.f32.xlu0 %v868
        %v937 = vpop.xlane.xlu0 %936
        %938 = vadd.xlane.f32.xlu0 %v869
        %v939 = vpop.xlane.xlu0 %938
        %940 = vadd.xlane.f32.xlu0 %v870
        %v941 = vpop.xlane.xlu0 %940
        %942 = vadd.xlane.f32.xlu0 %v871
        %v943 = vpop.xlane.xlu0 %942
        %944 = vadd.xlane.f32.xlu0 %v872
        %v945 = vpop.xlane.xlu0 %944
        %946 = vadd.xlane.f32.xlu0 %v873
        %v947 = vpop.xlane.xlu0 %946
        %948 = vadd.xlane.f32.xlu0 %v874
        %v949 = vpop.xlane.xlu0 %948
        %950 = vadd.xlane.f32.xlu0 %v875
        %v951 = vpop.xlane.xlu0 %950
        %952 = vadd.xlane.f32.xlu0 %v876
        %v953 = vpop.xlane.xlu0 %952
        %954 = vadd.xlane.f32.xlu0 %v877
        %v955 = vpop.xlane.xlu0 %954
        %956 = vadd.xlane.f32.xlu0 %v878
        %v957 = vpop.xlane.xlu0 %956
        %958 = vadd.xlane.f32.xlu0 %v879
        %v959 = vpop.xlane.xlu0 %958
        %960 = vadd.xlane.f32.xlu0 %v880
        %v961 = vpop.xlane.xlu0 %960
        %962 = vadd.xlane.f32.xlu0 %v881
        %v963 = vpop.xlane.xlu0 %962
        %964 = vadd.xlane.f32.xlu0 %v882
        %v965 = vpop.xlane.xlu0 %964
        %966 = vadd.xlane.f32.xlu0 %v883
        %v967 = vpop.xlane.xlu0 %966
        %968 = vadd.xlane.f32.xlu0 %v884
        %v969 = vpop.xlane.xlu0 %968
        %970 = vadd.xlane.f32.xlu0 %v885
        %v971 = vpop.xlane.xlu0 %970
        %972 = vadd.xlane.f32.xlu0 %v886
        %v973 = vpop.xlane.xlu0 %972
        %974 = vadd.xlane.f32.xlu0 %v887
        %v975 = vpop.xlane.xlu0 %974
        %976 = vadd.xlane.f32.xlu0 %v888
        %v977 = vpop.xlane.xlu0 %976
        %978 = vadd.xlane.f32.xlu0 %v889
        %v979 = vpop.xlane.xlu0 %978
        %980 = vadd.xlane.f32.xlu0 %v890
        %v981 = vpop.xlane.xlu0 %980
        %982 = vadd.xlane.f32.xlu0 %v891
        %v983 = vpop.xlane.xlu0 %982
        %984 = vadd.xlane.f32.xlu0 %v892
        %v985 = vpop.xlane.xlu0 %984
        %986 = vadd.xlane.f32.xlu0 %v893
        %v987 = vpop.xlane.xlu0 %986
        %988 = vadd.xlane.f32.xlu0 %v894
        %v989 = vpop.xlane.xlu0 %988
        %990 = vadd.xlane.f32.xlu0 %v895
        %v991 = vpop.xlane.xlu0 %990
        %v992 = vmul.f32 %v897, 0.03125
        %v993 = vmul.f32 %v899, 0.03125
        %v994 = vmul.f32 %v901, 0.03125
        %v995 = vmul.f32 %v903, 0.03125
        %v996 = vmul.f32 %v905, 0.03125
        %v997 = vmul.f32 %v907, 0.03125
        %v998 = vmul.f32 %v909, 0.03125
        %v999 = vmul.f32 %v911, 0.03125
        %v1000 = vmul.f32 %v913, 0.03125
        %v1001 = vmul.f32 %v915, 0.03125
        %v1002 = vmul.f32 %v917, 0.03125
        %v1003 = vmul.f32 %v919, 0.03125
        %v1004 = vmul.f32 %v921, 0.03125
        %v1005 = vmul.f32 %v923, 0.03125
        %v1006 = vmul.f32 %v925, 0.03125
        %v1007 = vmul.f32 %v927, 0.03125
        %v1008 = vmul.f32 %v929, 0.03125
        %v1009 = vmul.f32 %v931, 0.03125
        %v1010 = vmul.f32 %v933, 0.03125
        %v1011 = vmul.f32 %v935, 0.03125
        %v1012 = vmul.f32 %v937, 0.03125
        %v1013 = vmul.f32 %v939, 0.03125
        %v1014 = vmul.f32 %v941, 0.03125
        %v1015 = vmul.f32 %v943, 0.03125
        %v1016 = vmul.f32 %v945, 0.03125
        %v1017 = vmul.f32 %v947, 0.03125
        %v1018 = vmul.f32 %v949, 0.03125
        %v1019 = vmul.f32 %v951, 0.03125
        %v1020 = vmul.f32 %v953, 0.03125
        %v1021 = vmul.f32 %v955, 0.03125
        %v1022 = vmul.f32 %v957, 0.03125
        %v1023 = vmul.f32 %v959, 0.03125
        %v1024 = vmul.f32 %v961, 0.03125
        %v1025 = vmul.f32 %v963, 0.03125
        %v1026 = vmul.f32 %v965, 0.03125
        %v1027 = vmul.f32 %v967, 0.03125
        %v1028 = vmul.f32 %v969, 0.03125
        %v1029 = vmul.f32 %v971, 0.03125
        %v1030 = vmul.f32 %v973, 0.03125
        %v1031 = vmul.f32 %v975, 0.03125
        %v1032 = vmul.f32 %v977, 0.03125
        %v1033 = vmul.f32 %v979, 0.03125
        %v1034 = vmul.f32 %v981, 0.03125
        %v1035 = vmul.f32 %v983, 0.03125
        %v1036 = vmul.f32 %v985, 0.03125
        %v1037 = vmul.f32 %v987, 0.03125
        %v1038 = vmul.f32 %v989, 0.03125
        %v1039 = vmul.f32 %v991, 0.03125
        %v1040 = vmul.f32 %v800, %v800
        %v1041 = vmul.f32 %v801, %v801
        %v1042 = vmul.f32 %v802, %v802
        %v1043 = vmul.f32 %v803, %v803
        %v1044 = vmul.f32 %v804, %v804
        %v1045 = vmul.f32 %v805, %v805
        %v1046 = vmul.f32 %v806, %v806
        %v1047 = vmul.f32 %v807, %v807
        %v1048 = vmul.f32 %v808, %v808
        %v1049 = vmul.f32 %v809, %v809
        %v1050 = vmul.f32 %v810, %v810
        %v1051 = vmul.f32 %v811, %v811
        %v1052 = vmul.f32 %v812, %v812
        %v1053 = vmul.f32 %v813, %v813
        %v1054 = vmul.f32 %v814, %v814
        %v1055 = vmul.f32 %v815, %v815
        %v1056 = vmul.f32 %v816, %v816
        %v1057 = vmul.f32 %v817, %v817
        %v1058 = vmul.f32 %v818, %v818
        %v1059 = vmul.f32 %v819, %v819
        %v1060 = vmul.f32 %v820, %v820
        %v1061 = vmul.f32 %v821, %v821
        %v1062 = vmul.f32 %v822, %v822
        %v1063 = vmul.f32 %v823, %v823
        %v1064 = vmul.f32 %v824, %v824
        %v1065 = vmul.f32 %v825, %v825
        %v1066 = vmul.f32 %v826, %v826
        %v1067 = vmul.f32 %v827, %v827
        %v1068 = vmul.f32 %v828, %v828
        %v1069 = vmul.f32 %v829, %v829
        %v1070 = vmul.f32 %v830, %v830
        %v1071 = vmul.f32 %v831, %v831
        %v1072 = vmul.f32 %v832, %v832
        %v1073 = vmul.f32 %v833, %v833
        %v1074 = vmul.f32 %v834, %v834
        %v1075 = vmul.f32 %v835, %v835
        %v1076 = vmul.f32 %v836, %v836
        %v1077 = vmul.f32 %v837, %v837
        %v1078 = vmul.f32 %v838, %v838
        %v1079 = vmul.f32 %v839, %v839
        %v1080 = vmul.f32 %v840, %v840
        %v1081 = vmul.f32 %v841, %v841
        %v1082 = vmul.f32 %v842, %v842
        %v1083 = vmul.f32 %v843, %v843
        %v1084 = vmul.f32 %v844, %v844
        %v1085 = vmul.f32 %v845, %v845
        %v1086 = vmul.f32 %v846, %v846
        %v1087 = vmul.f32 %v847, %v847
        %v1088 = vsub.f32 %v992, %v1040
        %v1089 = vsub.f32 %v993, %v1041
        %v1090 = vsub.f32 %v994, %v1042
        %v1091 = vsub.f32 %v995, %v1043
        %v1092 = vsub.f32 %v996, %v1044
        %v1093 = vsub.f32 %v997, %v1045
        %v1094 = vsub.f32 %v998, %v1046
        %v1095 = vsub.f32 %v999, %v1047
        %v1096 = vsub.f32 %v1000, %v1048
        %v1097 = vsub.f32 %v1001, %v1049
        %v1098 = vsub.f32 %v1002, %v1050
        %v1099 = vsub.f32 %v1003, %v1051
        %v1100 = vsub.f32 %v1004, %v1052
        %v1101 = vsub.f32 %v1005, %v1053
        %v1102 = vsub.f32 %v1006, %v1054
        %v1103 = vsub.f32 %v1007, %v1055
        %v1104 = vsub.f32 %v1008, %v1056
        %v1105 = vsub.f32 %v1009, %v1057
        %v1106 = vsub.f32 %v1010, %v1058
        %v1107 = vsub.f32 %v1011, %v1059
        %v1108 = vsub.f32 %v1012, %v1060
        %v1109 = vsub.f32 %v1013, %v1061
        %v1110 = vsub.f32 %v1014, %v1062
        %v1111 = vsub.f32 %v1015, %v1063
        %v1112 = vsub.f32 %v1016, %v1064
        %v1113 = vsub.f32 %v1017, %v1065
        %v1114 = vsub.f32 %v1018, %v1066
        %v1115 = vsub.f32 %v1019, %v1067
        %v1116 = vsub.f32 %v1020, %v1068
        %v1117 = vsub.f32 %v1021, %v1069
        %v1118 = vsub.f32 %v1022, %v1070
        %v1119 = vsub.f32 %v1023, %v1071
        %v1120 = vsub.f32 %v1024, %v1072
        %v1121 = vsub.f32 %v1025, %v1073
        %v1122 = vsub.f32 %v1026, %v1074
        %v1123 = vsub.f32 %v1027, %v1075
        %v1124 = vsub.f32 %v1028, %v1076
        %v1125 = vsub.f32 %v1029, %v1077
        %v1126 = vsub.f32 %v1030, %v1078
        %v1127 = vsub.f32 %v1031, %v1079
        %v1128 = vsub.f32 %v1032, %v1080
        %v1129 = vsub.f32 %v1033, %v1081
        %v1130 = vsub.f32 %v1034, %v1082
        %v1131 = vsub.f32 %v1035, %v1083
        %v1132 = vsub.f32 %v1036, %v1084
        %v1133 = vsub.f32 %v1037, %v1085
        %v1134 = vsub.f32 %v1038, %v1086
        %v1135 = vsub.f32 %v1039, %v1087
        %v1136 = vsub.f32 %v514, %v800
        %v1137 = vsub.f32 %v517, %v801
        %v1138 = vsub.f32 %v522, %v802
        %v1139 = vsub.f32 %v525, %v803
        %v1140 = vsub.f32 %v530, %v804
        %v1141 = vsub.f32 %v533, %v805
        %v1142 = vsub.f32 %v538, %v806
        %v1143 = vsub.f32 %v541, %v807
        %v1144 = vsub.f32 %v546, %v808
        %v1145 = vsub.f32 %v549, %v809
        %v1146 = vsub.f32 %v554, %v810
        %v1147 = vsub.f32 %v557, %v811
        %v1148 = vsub.f32 %v562, %v812
        %v1149 = vsub.f32 %v565, %v813
        %v1150 = vsub.f32 %v570, %v814
        %v1151 = vsub.f32 %v573, %v815
        %v1152 = vsub.f32 %v578, %v816
        %v1153 = vsub.f32 %v581, %v817
        %v1154 = vsub.f32 %v586, %v818
        %v1155 = vsub.f32 %v589, %v819
        %v1156 = vsub.f32 %v594, %v820
        %v1157 = vsub.f32 %v597, %v821
        %v1158 = vsub.f32 %v602, %v822
        %v1159 = vsub.f32 %v605, %v823
        %v1160 = vsub.f32 %v610, %v824
        %v1161 = vsub.f32 %v613, %v825
        %v1162 = vsub.f32 %v618, %v826
        %v1163 = vsub.f32 %v621, %v827
        %v1164 = vsub.f32 %v626, %v828
        %v1165 = vsub.f32 %v629, %v829
        %v1166 = vsub.f32 %v634, %v830
        %v1167 = vsub.f32 %v637, %v831
        %v1168 = vsub.f32 %v642, %v832
        %v1169 = vsub.f32 %v645, %v833
        %v1170 = vsub.f32 %v650, %v834
        %v1171 = vsub.f32 %v653, %v835
        %v1172 = vsub.f32 %v658, %v836
        %v1173 = vsub.f32 %v661, %v837
        %v1174 = vsub.f32 %v666, %v838
        %v1175 = vsub.f32 %v669, %v839
        %v1176 = vsub.f32 %v674, %v840
        %v1177 = vsub.f32 %v677, %v841
        %v1178 = vsub.f32 %v682, %v842
        %v1179 = vsub.f32 %v685, %v843
        %v1180 = vsub.f32 %v690, %v844
        %v1181 = vsub.f32 %v693, %v845
        %v1182 = vsub.f32 %v698, %v846
        %v1183 = vsub.f32 %v701, %v847
        %v1184 = vadd.f32 %v1088, 1e-05
        %v1185 = vadd.f32 %v1089, 1e-05
        %v1186 = vadd.f32 %v1090, 1e-05
        %v1187 = vadd.f32 %v1091, 1e-05
        %v1188 = vadd.f32 %v1092, 1e-05
        %v1189 = vadd.f32 %v1093, 1e-05
        %v1190 = vadd.f32 %v1094, 1e-05
        %v1191 = vadd.f32 %v1095, 1e-05
        %v1192 = vadd.f32 %v1096, 1e-05
        %v1193 = vadd.f32 %v1097, 1e-05
        %v1194 = vadd.f32 %v1098, 1e-05
        %v1195 = vadd.f32 %v1099, 1e-05
        %v1196 = vadd.f32 %v1100, 1e-05
        %v1197 = vadd.f32 %v1101, 1e-05
        %v1198 = vadd.f32 %v1102, 1e-05
        %v1199 = vadd.f32 %v1103, 1e-05
        %v1200 = vadd.f32 %v1104, 1e-05
        %v1201 = vadd.f32 %v1105, 1e-05
        %v1202 = vadd.f32 %v1106, 1e-05
        %v1203 = vadd.f32 %v1107, 1e-05
        %v1204 = vadd.f32 %v1108, 1e-05
        %v1205 = vadd.f32 %v1109, 1e-05
        %v1206 = vadd.f32 %v1110, 1e-05
        %v1207 = vadd.f32 %v1111, 1e-05
        %v1208 = vadd.f32 %v1112, 1e-05
        %v1209 = vadd.f32 %v1113, 1e-05
        %v1210 = vadd.f32 %v1114, 1e-05
        %v1211 = vadd.f32 %v1115, 1e-05
        %v1212 = vadd.f32 %v1116, 1e-05
        %v1213 = vadd.f32 %v1117, 1e-05
        %v1214 = vadd.f32 %v1118, 1e-05
        %v1215 = vadd.f32 %v1119, 1e-05
        %v1216 = vadd.f32 %v1120, 1e-05
        %v1217 = vadd.f32 %v1121, 1e-05
        %v1218 = vadd.f32 %v1122, 1e-05
        %v1219 = vadd.f32 %v1123, 1e-05
        %v1220 = vadd.f32 %v1124, 1e-05
        %v1221 = vadd.f32 %v1125, 1e-05
        %v1222 = vadd.f32 %v1126, 1e-05
        %v1223 = vadd.f32 %v1127, 1e-05
        %v1224 = vadd.f32 %v1128, 1e-05
        %v1225 = vadd.f32 %v1129, 1e-05
        %v1226 = vadd.f32 %v1130, 1e-05
        %v1227 = vadd.f32 %v1131, 1e-05
        %v1228 = vadd.f32 %v1132, 1e-05
        %v1229 = vadd.f32 %v1133, 1e-05
        %v1230 = vadd.f32 %v1134, 1e-05
        %v1231 = vadd.f32 %v1135, 1e-05
        %v1232 = vrsqrt.pop %v1184
        %v1233 = vrsqrt.pop %v1185
        %v1234 = vrsqrt.pop %v1186
        %v1235 = vrsqrt.pop %v1187
        %v1236 = vrsqrt.pop %v1188
        %v1237 = vrsqrt.pop %v1189
        %v1238 = vrsqrt.pop %v1190
        %v1239 = vrsqrt.pop %v1191
        %v1240 = vrsqrt.pop %v1192
        %v1241 = vrsqrt.pop %v1193
        %v1242 = vrsqrt.pop %v1194
        %v1243 = vrsqrt.pop %v1195
        %v1244 = vrsqrt.pop %v1196
        %v1245 = vrsqrt.pop %v1197
        %v1246 = vrsqrt.pop %v1198
        %v1247 = vrsqrt.pop %v1199
        %v1248 = vrsqrt.pop %v1200
        %v1249 = vrsqrt.pop %v1201
        %v1250 = vrsqrt.pop %v1202
        %v1251 = vrsqrt.pop %v1203
        %v1252 = vrsqrt.pop %v1204
        %v1253 = vrsqrt.pop %v1205
        %v1254 = vrsqrt.pop %v1206
        %v1255 = vrsqrt.pop %v1207
        %v1256 = vrsqrt.pop %v1208
        %v1257 = vrsqrt.pop %v1209
        %v1258 = vrsqrt.pop %v1210
        %v1259 = vrsqrt.pop %v1211
        %v1260 = vrsqrt.pop %v1212
        %v1261 = vrsqrt.pop %v1213
        %v1262 = vrsqrt.pop %v1214
        %v1263 = vrsqrt.pop %v1215
        %v1264 = vrsqrt.pop %v1216
        %v1265 = vrsqrt.pop %v1217
        %v1266 = vrsqrt.pop %v1218
        %v1267 = vrsqrt.pop %v1219
        %v1268 = vrsqrt.pop %v1220
        %v1269 = vrsqrt.pop %v1221
        %v1270 = vrsqrt.pop %v1222
        %v1271 = vrsqrt.pop %v1223
        %v1272 = vrsqrt.pop %v1224
        %v1273 = vrsqrt.pop %v1225
        %v1274 = vrsqrt.pop %v1226
        %v1275 = vrsqrt.pop %v1227
        %v1276 = vrsqrt.pop %v1228
        %v1277 = vrsqrt.pop %v1229
        %v1278 = vrsqrt.pop %v1230
        %v1279 = vrsqrt.pop %v1231
        %v1280 = vmul.f32 %v1136, %v1232
        %v1281 = vmul.f32 %v1137, %v1233
        %v1282 = vmul.f32 %v1138, %v1234
        %v1283 = vmul.f32 %v1139, %v1235
        %v1284 = vmul.f32 %v1140, %v1236
        %v1285 = vmul.f32 %v1141, %v1237
        %v1286 = vmul.f32 %v1142, %v1238
        %v1287 = vmul.f32 %v1143, %v1239
        %v1288 = vmul.f32 %v1144, %v1240
        %v1289 = vmul.f32 %v1145, %v1241
        %v1290 = vmul.f32 %v1146, %v1242
        %v1291 = vmul.f32 %v1147, %v1243
        %v1292 = vmul.f32 %v1148, %v1244
        %v1293 = vmul.f32 %v1149, %v1245
        %v1294 = vmul.f32 %v1150, %v1246
        %v1295 = vmul.f32 %v1151, %v1247
        %v1296 = vmul.f32 %v1152, %v1248
        %v1297 = vmul.f32 %v1153, %v1249
        %v1298 = vmul.f32 %v1154, %v1250
        %v1299 = vmul.f32 %v1155, %v1251
        %v1300 = vmul.f32 %v1156, %v1252
        %v1301 = vmul.f32 %v1157, %v1253
        %v1302 = vmul.f32 %v1158, %v1254
        %v1303 = vmul.f32 %v1159, %v1255
        %v1304 = vmul.f32 %v1160, %v1256
        %v1305 = vmul.f32 %v1161, %v1257
        %v1306 = vmul.f32 %v1162, %v1258
        %v1307 = vmul.f32 %v1163, %v1259
        %v1308 = vmul.f32 %v1164, %v1260
        %v1309 = vmul.f32 %v1165, %v1261
        %v1310 = vmul.f32 %v1166, %v1262
        %v1311 = vmul.f32 %v1167, %v1263
        %v1312 = vmul.f32 %v1168, %v1264
        %v1313 = vmul.f32 %v1169, %v1265
        %v1314 = vmul.f32 %v1170, %v1266
        %v1315 = vmul.f32 %v1171, %v1267
        %v1316 = vmul.f32 %v1172, %v1268
        %v1317 = vmul.f32 %v1173, %v1269
        %v1318 = vmul.f32 %v1174, %v1270
        %v1319 = vmul.f32 %v1175, %v1271
        %v1320 = vmul.f32 %v1176, %v1272
        %v1321 = vmul.f32 %v1177, %v1273
        %v1322 = vmul.f32 %v1178, %v1274
        %v1323 = vmul.f32 %v1179, %v1275
        %v1324 = vmul.f32 %v1180, %v1276
        %v1325 = vmul.f32 %v1181, %v1277
        %v1326 = vmul.f32 %v1182, %v1278
        %v1327 = vmul.f32 %v1183, %v1279
        %v1328 = vld [vmem:[%s3] sm:$0x1]
        %v1330 = vlaneseq
        %v1331 = vshrl.u32 %v1330, 7
        %v1332 = vsub.s32 0, %v1331
        %v1333 = vrot.slane %v1328, %v1332
        %v1335 = vmul.f32 %v1280, %v1333
        %v1336 = vmul.f32 %v1281, %v1333
        %v1337 = vmul.f32 %v1282, %v1333
        %v1338 = vmul.f32 %v1283, %v1333
        %v1339 = vmul.f32 %v1284, %v1333
        %v1340 = vmul.f32 %v1285, %v1333
        %v1341 = vmul.f32 %v1286, %v1333
        %v1342 = vmul.f32 %v1287, %v1333
        %v1343 = vmul.f32 %v1288, %v1333
        %v1344 = vmul.f32 %v1289, %v1333
        %v1345 = vmul.f32 %v1290, %v1333
        %v1346 = vmul.f32 %v1291, %v1333
        %v1347 = vmul.f32 %v1292, %v1333
        %v1348 = vmul.f32 %v1293, %v1333
        %v1349 = vmul.f32 %v1294, %v1333
        %v1350 = vmul.f32 %v1295, %v1333
        %v1351 = vmul.f32 %v1296, %v1333
        %v1352 = vmul.f32 %v1297, %v1333
        %v1353 = vmul.f32 %v1298, %v1333
        %v1354 = vmul.f32 %v1299, %v1333
        %v1355 = vmul.f32 %v1300, %v1333
        %v1356 = vmul.f32 %v1301, %v1333
        %v1357 = vmul.f32 %v1302, %v1333
        %v1358 = vmul.f32 %v1303, %v1333
        %v1359 = vmul.f32 %v1304, %v1333
        %v1360 = vmul.f32 %v1305, %v1333
        %v1361 = vmul.f32 %v1306, %v1333
        %v1362 = vmul.f32 %v1307, %v1333
        %v1363 = vmul.f32 %v1308, %v1333
        %v1364 = vmul.f32 %v1309, %v1333
        %v1365 = vmul.f32 %v1310, %v1333
        %v1366 = vmul.f32 %v1311, %v1333
        %v1367 = vmul.f32 %v1312, %v1333
        %v1368 = vmul.f32 %v1313, %v1333
        %v1369 = vmul.f32 %v1314, %v1333
        %v1370 = vmul.f32 %v1315, %v1333
        %v1371 = vmul.f32 %v1316, %v1333
        %v1372 = vmul.f32 %v1317, %v1333
        %v1373 = vmul.f32 %v1318, %v1333
        %v1374 = vmul.f32 %v1319, %v1333
        %v1375 = vmul.f32 %v1320, %v1333
        %v1376 = vmul.f32 %v1321, %v1333
        %v1377 = vmul.f32 %v1322, %v1333
        %v1378 = vmul.f32 %v1323, %v1333
        %v1379 = vmul.f32 %v1324, %v1333
        %v1380 = vmul.f32 %v1325, %v1333
        %v1381 = vmul.f32 %v1326, %v1333
        %v1382 = vmul.f32 %v1327, %v1333
        %v1383 = vld [vmem:[%s4] sm:$0x1]
        %v1385 = vlaneseq
        %v1386 = vshrl.u32 %v1385, 7
        %v1387 = vsub.s32 0, %v1386
        %v1388 = vrot.slane %v1383, %v1387
        %v1390 = vadd.f32 %v1335, %v1388
        %v1391 = vadd.f32 %v1336, %v1388
        %v1392 = vadd.f32 %v1337, %v1388
        %v1393 = vadd.f32 %v1338, %v1388
        %v1394 = vadd.f32 %v1339, %v1388
        %v1395 = vadd.f32 %v1340, %v1388
        %v1396 = vadd.f32 %v1341, %v1388
        %v1397 = vadd.f32 %v1342, %v1388
        %v1398 = vadd.f32 %v1343, %v1388
        %v1399 = vadd.f32 %v1344, %v1388
        %v1400 = vadd.f32 %v1345, %v1388
        %v1401 = vadd.f32 %v1346, %v1388
        %v1402 = vadd.f32 %v1347, %v1388
        %v1403 = vadd.f32 %v1348, %v1388
        %v1404 = vadd.f32 %v1349, %v1388
        %v1405 = vadd.f32 %v1350, %v1388
        %v1406 = vadd.f32 %v1351, %v1388
        %v1407 = vadd.f32 %v1352, %v1388
        %v1408 = vadd.f32 %v1353, %v1388
        %v1409 = vadd.f32 %v1354, %v1388
        %v1410 = vadd.f32 %v1355, %v1388
        %v1411 = vadd.f32 %v1356, %v1388
        %v1412 = vadd.f32 %v1357, %v1388
        %v1413 = vadd.f32 %v1358, %v1388
        %v1414 = vadd.f32 %v1359, %v1388
        %v1415 = vadd.f32 %v1360, %v1388
        %v1416 = vadd.f32 %v1361, %v1388
        %v1417 = vadd.f32 %v1362, %v1388
        %v1418 = vadd.f32 %v1363, %v1388
        %v1419 = vadd.f32 %v1364, %v1388
        %v1420 = vadd.f32 %v1365, %v1388
        %v1421 = vadd.f32 %v1366, %v1388
        %v1422 = vadd.f32 %v1367, %v1388
        %v1423 = vadd.f32 %v1368, %v1388
        %v1424 = vadd.f32 %v1369, %v1388
        %v1425 = vadd.f32 %v1370, %v1388
        %v1426 = vadd.f32 %v1371, %v1388
        %v1427 = vadd.f32 %v1372, %v1388
        %v1428 = vadd.f32 %v1373, %v1388
        %v1429 = vadd.f32 %v1374, %v1388
        %v1430 = vadd.f32 %v1375, %v1388
        %v1431 = vadd.f32 %v1376, %v1388
        %v1432 = vadd.f32 %v1377, %v1388
        %v1433 = vadd.f32 %v1378, %v1388
        %v1434 = vadd.f32 %v1379, %v1388
        %v1435 = vadd.f32 %v1380, %v1388
        %v1436 = vadd.f32 %v1381, %v1388
        %v1437 = vadd.f32 %v1382, %v1388
        %v1438 = vld [vmem:[%s294] sm:$0x7]
        %v1439 = vlaneseq
        %v1440 = vshrl.u32 %v1439, 7
        %v1441 = vlaneseq
        %v1442 = vshrl.u32 %v1441, 7
        %v1443 = vsub.s32 0, %v1442
        %v1444 = vrot.slane %v1438, %v1443
        %v1445 = vlaneseq
        %v1446 = vshrl.u32 %v1445, 7
        %v1447 = vsub.s32 1, %v1446
        %v1448 = vrot.slane %v1438, %v1447
        %v1449 = vlaneseq
        %v1450 = vshrl.u32 %v1449, 7
        %v1451 = vsub.s32 2, %v1450
        %v1452 = vrot.slane %v1438, %v1451
        %vm1453 = vcmp.eq.s32.totalorder %v1440, %v1444
        %vm1454 = vcmp.eq.s32.totalorder %v1440, %v1448
        %vm1455 = vcmp.eq.s32.totalorder %v1440, %v1452
        %v1456 = vsel %vm1453, 1, 0
        %v1457 = vsel %vm1454, 1, 0
        %v1458 = vsel %vm1455, 1, 0
        %v1459 = vcvt.s32.f32 %v1456
        %v1460 = vcvt.s32.f32 %v1457
        %v1461 = vcvt.s32.f32 %v1458
        %v1462 = vpack.c.bf16 %v1459, %v1459
        %v1463 = vpack.c.bf16 %v1460, %v1460
        %v1464 = vpack.c.bf16 %v1461, %v1461
        %v1465 = vld [vmem:[%s281] sm:$0xff]
        %v1466 = vpack.c.bf16 %v1391, %v1390
        %v1467 = vpack.c.bf16 %v1393, %v1392
        %v1468 = vpack.c.bf16 %v1395, %v1394
        %v1469 = vpack.c.bf16 %v1397, %v1396
        %v1470 = vpack.c.bf16 %v1399, %v1398
        %v1471 = vpack.c.bf16 %v1401, %v1400
        %v1472 = vpack.c.bf16 %v1403, %v1402
        %v1473 = vpack.c.bf16 %v1405, %v1404
        %v1474 = vpack.c.bf16 %v1407, %v1406
        %v1475 = vpack.c.bf16 %v1409, %v1408
        %v1476 = vpack.c.bf16 %v1411, %v1410
        %v1477 = vpack.c.bf16 %v1413, %v1412
        %v1478 = vpack.c.bf16 %v1415, %v1414
        %v1479 = vpack.c.bf16 %v1417, %v1416
        %v1480 = vpack.c.bf16 %v1419, %v1418
        %v1481 = vpack.c.bf16 %v1421, %v1420
        %v1482 = vpack.c.bf16 %v1423, %v1422
        %v1483 = vpack.c.bf16 %v1425, %v1424
        %v1484 = vpack.c.bf16 %v1427, %v1426
        %v1485 = vpack.c.bf16 %v1429, %v1428
        %v1486 = vpack.c.bf16 %v1431, %v1430
        %v1487 = vpack.c.bf16 %v1433, %v1432
        %v1488 = vpack.c.bf16 %v1435, %v1434
        %v1489 = vpack.c.bf16 %v1437, %v1436
        %1490 = vmatprep.subr.bf16.mxu0 0
        %1491 = vmatpush1.bf16.msra.mxu0 %v1466
        %1492 = vmatprep.subr.bf16.mxu0 0
        %1493 = vmatpush1.bf16.msra.mxu0 %v1467
        %1494 = vmatprep.subr.bf16.mxu0 0
        %1495 = vmatpush1.bf16.msra.mxu0 %v1468
        %1496 = vmatprep.subr.bf16.mxu0 0
        %1497 = vmatpush1.bf16.msra.mxu0 %v1469
        %1498 = vmatprep.subr.bf16.mxu0 0
        %1499 = vmatpush1.bf16.msra.mxu0 %v1470
        %1500 = vmatprep.subr.bf16.mxu0 0
        %1501 = vmatpush1.bf16.msra.mxu0 %v1471
        %1502 = vmatprep.subr.bf16.mxu0 0
        %1503 = vmatpush1.bf16.msra.mxu0 %v1472
        %1504 = vmatprep.subr.bf16.mxu0 0
        %1505 = vmatpush1.bf16.msra.mxu0 %v1473
        %1506 = vmatprep.subr.bf16.mxu0 0
        %1507 = vmatpush1.bf16.msra.mxu0 %v1474
        %1508 = vmatprep.subr.bf16.mxu0 0
        %1509 = vmatpush1.bf16.msra.mxu0 %v1475
        %1510 = vmatprep.subr.bf16.mxu0 0
        %1511 = vmatpush1.bf16.msra.mxu0 %v1476
        %1512 = vmatprep.subr.bf16.mxu0 0
        %1513 = vmatpush1.bf16.msra.mxu0 %v1477
        %1514 = vmatprep.subr.bf16.mxu0 0
        %1515 = vmatpush1.bf16.msra.mxu0 %v1478
        %1516 = vmatprep.subr.bf16.mxu0 0
        %1517 = vmatpush1.bf16.msra.mxu0 %v1479
        %1518 = vmatprep.subr.bf16.mxu0 0
        %1519 = vmatpush1.bf16.msra.mxu0 %v1480
        %1520 = vmatprep.subr.bf16.mxu0 0
        %1521 = vmatpush1.bf16.msra.mxu0 %v1481
        %1522 = vmatprep.mubr.bf16.mxu0 %v1463
        %1523 = vmatmul.mubr.bf16.gmra.mrb[0].mxu0 %v1462
        %v1524 = vpop.f32.mrb[0].mxu0
        %v1525 = vadd.f32 0.0, %v1524
        %v1526 = vpop.f32.mrb[0].mxu0
        %v1527 = vpop.f32.mrb[0].mxu0
        %v1528 = vpop.f32.mrb[0].mxu0
        %1529 = vdwg.mxu0
        %1530 = vmatprep.subr.bf16.mxu0 0
        %1531 = vmatpush1.bf16.msra.mxu0 %v1482
        %1532 = vmatprep.subr.bf16.mxu0 0
        %1533 = vmatpush1.bf16.msra.mxu0 %v1483
        %1534 = vmatprep.subr.bf16.mxu0 0
        %1535 = vmatpush1.bf16.msra.mxu0 %v1484
        %1536 = vmatprep.subr.bf16.mxu0 0
        %1537 = vmatpush1.bf16.msra.mxu0 %v1485
        %1538 = vmatprep.subr.bf16.mxu0 0
        %1539 = vmatpush1.bf16.msra.mxu0 %v1486
        %1540 = vmatprep.subr.bf16.mxu0 0
        %1541 = vmatpush1.bf16.msra.mxu0 %v1487
        %1542 = vmatprep.subr.bf16.mxu0 0
        %1543 = vmatpush1.bf16.msra.mxu0 %v1488
        %1544 = vmatprep.subr.bf16.mxu0 0
        %1545 = vmatpush1.bf16.msra.mxu0 %v1489
        %1546 = vmatprep.subr.bf16.mxu0 0
        %1547 = vmatpush1.bf16.msra.mxu0 0
        %1548 = vmatprep.subr.bf16.mxu0 0
        %1549 = vmatpush1.bf16.msra.mxu0 0
        %1550 = vmatprep.subr.bf16.mxu0 0
        %1551 = vmatpush1.bf16.msra.mxu0 0
        %1552 = vmatprep.subr.bf16.mxu0 0
        %1553 = vmatpush1.bf16.msra.mxu0 0
        %1554 = vmatprep.subr.bf16.mxu0 0
        %1555 = vmatpush1.bf16.msra.mxu0 0
        %1556 = vmatprep.subr.bf16.mxu0 0
        %1557 = vmatpush1.bf16.msra.mxu0 0
        %1558 = vmatprep.subr.bf16.mxu0 0
        %1559 = vmatpush1.bf16.msra.mxu0 0
        %1560 = vmatprep.subr.bf16.mxu0 0
        %1561 = vmatpush1.bf16.msra.mxu0 0
        %1562 = vmatprep.mubr.bf16.mxu0 0
        %1563 = vmatmul.mubr.bf16.gmra.mrb[0].mxu0 %v1464
        %v1564 = vpop.f32.mrb[0].mxu0
        %v1565 = vadd.f32 %v1525, %v1564
        %v1566 = vpop.f32.mrb[0].mxu0
        %v1567 = vpop.f32.mrb[0].mxu0
        %v1568 = vpop.f32.mrb[0].mxu0
        %1569 = vdwg.mxu0
        %v1570 = vadd.f32 %v1465, %v1565
        %1571 = vst [vmem:[%s281] sm:$0xff] %v1570
        %s1572 = sand.u32 %s180, 1
        %s1573 = scalar_lea.sflag [#allocation3], %s1572
        %s1574 = sand.u32 %s180, 1
        %s1575 = smul.addr %s1574, 8
        %s1576 = scalar_lea.vmem [#allocation2], %s1575
        // Predicated region
        $region49: #{tpu_custom_call.1} parent=43 // pred_check
          %p1577 = pneg %p190
        $region50: #{tpu_custom_call.1} parent=43 // pred_check_branch
          %1579 = sbr.rel (%p1577) target = $region52
        $region51: #{tpu_custom_call.1} parent=43 // pred_region
          %s1581 = ssub.s32 128, 128
          %1582 = vsyncadd %s1573, %s1581
          %s1583 = smul.addr %s24, 128
          %s1584 = scalar_lea.hbm %s6, %s1583
          %s1586 = sshll.u32 %s1576, 4
          %s1587 = int_to_ptr.vmem [resolvable:$true] %s1586
          %1589 = dma.vmem_to_hbm [thread:$0]  %s1587, 128, %s1584, %s1573
        $region52: #{tpu_custom_call.1} parent=43 // pred_fallthru
          _
      $region44: #{tpu_custom_call.1} parent=5 // pred_fallthru
        _
      %p1590 = scmp.le.s32.totalorder 2, %s15
      // Predicated region
      $region53: #{tpu_custom_call.1} parent=5 // pred_check
        %p1591 = pneg %p1590
      $region54: #{tpu_custom_call.1} parent=5 // pred_check_branch
        %1593 = sbr.rel (%p1591) target = $region56
      $region55: #{tpu_custom_call.1} parent=5 // pred_region
        %s1594 = ssub.s32 %s15, 2
        // Predicated region
        $region57: #{tpu_custom_call.1} parent=55 // pred_check
          %p1595 = pneg %p196
        $region58: #{tpu_custom_call.1} parent=55 // pred_check_branch
          %1597 = sbr.rel (%p1595) target = $region60
        $region59: #{tpu_custom_call.1} parent=55 // pred_region
          %s1598 = sand.u32 %s181, 1
          %s1599 = scalar_lea.sflag [#allocation3], %s1598
          %s1600 = sand.u32 %s181, 1
          %s1601 = smul.addr %s1600, 8
          %s1602 = scalar_lea.vmem [#allocation2], %s1601
          %1603 = dma.done %s1599, 128
        $region60: #{tpu_custom_call.1} parent=55 // pred_fallthru
          _
      $region56: #{tpu_custom_call.1} parent=5 // pred_fallthru
        _
    $region6: #{tpu_custom_call.1} parent=1 // loop_footer
      %s19 = sadd.s32 1, %s15
    $region7: #{tpu_custom_call.1} parent=1 // loop_footer_branch
      %14 = sbr.rel target = $region3
    $region8: #{tpu_custom_call.1} parent=1 // loop_exit
      _
    %1604 = vsyncpa [#allocation3], 1
    %s1605 = scalar_lea.sflag [#allocation3], 1
    %1606 = vsyncpa %s1605, 1

</llo_original>
